<compile_context>
chip_gen: v7x
topology: tpu7x:2x2x1
jax: 0.10.0
libtpu: 0.0.40
codegen_flags: <defaults>
</compile_context>

<pallas_src>
import functools

import jax
import jax.numpy as jnp
import numpy as np
from jax.experimental import pallas as pl
from jax.experimental.pallas import tpu as pltpu


# ----------------------------------------------------------------------------
# Static parameter-pack layout (shared by wrapper packing and kernel slicing)
# ----------------------------------------------------------------------------
def _param_layout(num_stages, num_layers, f_maps, in_dim, num_classes):
    """Offsets of every weight / bias inside the packed slabs.

    Weight slab (total_rows, wcols): matrix occupies rows [r, r+rows), cols [0, cols).
    Bias slab   (brows, num_bias)  : bias j occupies column j, rows [0, rows).
    All row offsets are multiples of 8 (sublane aligned) for the shapes used here.
    """
    stages = []
    row, col = 0, 0
    for s in range(num_stages):
        din = in_dim if s == 0 else num_classes
        w_in = (row, f_maps, din); row += f_maps
        b_in = (col, f_maps); col += 1
        layers = []
        for _ in range(num_layers):
            w3f = (row, f_maps, 3 * f_maps); row += f_maps
            b3 = (col, f_maps); col += 1
            w1 = (row, f_maps, f_maps); row += f_maps
            b1 = (col, f_maps); col += 1
            layers.append((w3f, b3, w1, b1))
        w_out = (row, num_classes, f_maps); row += num_classes
        b_out = (col, num_classes); col += 1
        stages.append((w_in, b_in, tuple(layers), w_out, b_out))
    return tuple(stages), row, col


# ----------------------------------------------------------------------------
# In-kernel building blocks (activations stay in vregs/VMEM, single batch elem)
# ----------------------------------------------------------------------------
def _wslice(w_ref, slot):
    r, rows, cols = slot
    return w_ref[r:r + rows, 0:cols]          # bf16 (rows, cols), static slice


def _bslice(b_ref, slot):
    c, rows = slot
    return b_ref[0:rows, c:c + 1]             # f32 (rows, 1), static slice


def _dilated_residual(h, w3f, b3, w1, b1, mvec, pm_lo, pm_hi, d, T):
    # h: (F, T) f32.  x[t-d] / x[t+d] via XLU lane rotations; the precomputed
    # pad masks zero the wrapped lanes (== the dilated conv's zero padding).
    h_m = pltpu.roll(h, shift=d, axis=1) * pm_lo       # lane t <- t-d
    h_p = pltpu.roll(h, shift=T - d, axis=1) * pm_hi   # lane t <- t+d
    # One K=3F MXU matmul (weights pre-fused to (F, 3F)); bf16 in, f32 accumulate.
    hcat = jnp.concatenate([h_m, h, h_p], axis=0).astype(jnp.bfloat16)   # (3F, T)
    acc = jnp.dot(w3f, hcat, preferred_element_type=jnp.float32) + b3    # conv_dilated
    acc = jnp.maximum(acc, 0.0)                                          # ReLU
    out = jnp.dot(w1, acc.astype(jnp.bfloat16),
                  preferred_element_type=jnp.float32) + b1               # conv_1x1
    return (h + out) * mvec                                              # residual*mask


def _softmax_mask(x, mvec):
    # Softmax over channels (sublane axis), then * mask.  Exact divide: a tiny
    # (1, T) op, and approximate-reciprocal error would feed every later stage.
    x_max = jnp.max(x, axis=0, keepdims=True)
    e = jnp.exp(x - x_max)
    return e / jnp.sum(e, axis=0, keepdims=True) * mvec


def _ms_tcn_kernel(x_ref, m_ref, pm_ref, w_ref, b_ref, out_ref, *, layout, T):
    # x_ref : (1, Cin, T)     m_ref : (1, 1, T)     pm_ref : (2L, T)
    # w_ref : (total_rows, wcols) bf16              b_ref  : (brows, num_bias) f32
    # out_ref: (num_stages, 1, num_classes, T)
    x = x_ref[0]                 # (Cin, T)
    mvec = m_ref[0]              # (1, T)
    pm = pm_ref[...]             # (2L, T)  hoisted out of all loops

    out = None
    for s, (w_in, b_in, layers, w_out, b_out) in enumerate(layout):
        inp = x if s == 0 else _softmax_mask(out, mvec)
        h = jnp.dot(_wslice(w_ref, w_in), inp.astype(jnp.bfloat16),
                    preferred_element_type=jnp.float32) + _bslice(b_ref, b_in)
        for li, (w3f, b3, w1, b1) in enumerate(layers):
            h = _dilated_residual(
                h, _wslice(w_ref, w3f), _bslice(b_ref, b3),
                _wslice(w_ref, w1), _bslice(b_ref, b1),
                mvec, pm[2 * li:2 * li + 1], pm[2 * li + 1:2 * li + 2],
                2 ** li, T)
        out = (jnp.dot(_wslice(w_ref, w_out), h.astype(jnp.bfloat16),
                       preferred_element_type=jnp.float32)
               + _bslice(b_ref, b_out)) * mvec
        out_ref[s, 0] = out


# ----------------------------------------------------------------------------
# Wrapper: parameter packing + single pallas_call (grid over batch)
# ----------------------------------------------------------------------------
def multi_stage_forward(stage_params, x, mask):
    N, in_dim, T = x.shape
    num_stages = len(stage_params)
    num_layers = len(stage_params[0]["layers"])
    f_maps = stage_params[0]["w_in"].shape[0]
    num_classes = stage_params[0]["w_out"].shape[0]
    assert mask.shape == (N, 1, T)
    assert T % 128 == 0, "T must be a multiple of 128 (lane-dense blocks)"

    layout, total_rows, num_bias = _param_layout(
        num_stages, num_layers, f_maps, in_dim, num_classes)
    wcols = max(3 * f_maps, f_maps, in_dim, num_classes)
    brows = max(f_maps, num_classes)

    # Pack all weights into one bf16 slab (rows stacked, cols zero-padded) and all
    # biases into one f32 slab (stacked along lanes).  Order matches _param_layout.
    def pad_w(w):
        return jnp.pad(w, ((0, 0), (0, wcols - w.shape[1])))

    def pad_b(b):
        return jnp.pad(b, ((0, brows - b.shape[0]), (0, 0)))

    wblocks, bcols = [], []
    for sp in stage_params:
        wblocks.append(pad_w(sp["w_in"])); bcols.append(pad_b(sp["b_in"]))
        for lp in sp["layers"]:
            wblocks += [pad_w(lp["w3f"]), pad_w(lp["w1"])]
            bcols += [pad_b(lp["b3"]), pad_b(lp["b1"])]
        wblocks.append(pad_w(sp["w_out"])); bcols.append(pad_b(sp["b_out"]))
    wpack = jnp.concatenate(wblocks, axis=0).astype(jnp.bfloat16)
    bpack = jnp.concatenate(bcols, axis=1).astype(jnp.float32)
    assert wpack.shape == (total_rows, wcols)
    assert bpack.shape == (brows, num_bias)

    # Per-dilation zero-pad masks precomputed once (no in-kernel iota/%/compares).
    t_idx = jnp.arange(T)
    pm_rows = []
    for li in range(num_layers):
        d = 2 ** li
        pm_rows.append((t_idx >= d).astype(jnp.float32))
        pm_rows.append((t_idx < T - d).astype(jnp.float32))
    padmask = jnp.stack(pm_rows, axis=0)                        # (2L, T)

    kernel = functools.partial(_ms_tcn_kernel, layout=layout, T=T)

    return pl.pallas_call(
        kernel,
        out_shape=jax.ShapeDtypeStruct((num_stages, N, num_classes, T), jnp.float32),
        grid=(N,),
        in_specs=[
            pl.BlockSpec((1, in_dim, T), lambda n: (n, 0, 0)),
            pl.BlockSpec((1, 1, T), lambda n: (n, 0, 0)),
            pl.BlockSpec(padmask.shape, lambda n: (0, 0)),   # block-invariant (DMA'd once)
            pl.BlockSpec(wpack.shape, lambda n: (0, 0)),
            pl.BlockSpec(bpack.shape, lambda n: (0, 0)),
        ],
        out_specs=pl.BlockSpec((num_stages, 1, num_classes, T),
                               lambda n: (0, n, 0, 0)),
        compiler_params=pltpu.CompilerParams(
            dimension_semantics=("parallel",)),   # 2x on v7x (2 TCs); harmless elsewhere
    )(x, mask, padmask, wpack, bpack)


# ----------------------------------------------------------------------------
# Pure-JAX reference (for correctness check only, no Pallas)
# ----------------------------------------------------------------------------
def _ref_forward(stage_params, x, mask):
    m1 = mask[:, 0:1, :]

    def conv1x1(h, w, b):
        return jnp.einsum("oi,nit->not", w, h) + b[None]

    def dilres(h, w3f, b3, w1, b1, d):
        n, f, t = h.shape
        pad = jnp.zeros((n, f, d), h.dtype)
        h_m = jnp.concatenate([pad, h[:, :, : t - d]], axis=2)
        h_p = jnp.concatenate([h[:, :, d:], pad], axis=2)
        wm, wc, wp = w3f[:, :f], w3f[:, f:2 * f], w3f[:, 2 * f:]
        acc = (jnp.einsum("oi,nit->not", wm, h_m)
               + jnp.einsum("oi,nit->not", wc, h)
               + jnp.einsum("oi,nit->not", wp, h_p) + b3[None])
        acc = jnp.maximum(acc, 0.0)
        out = jnp.einsum("oi,nit->not", w1, acc) + b1[None]
        return (h + out) * mask

    def stage(sp, h):
        h = conv1x1(h, sp["w_in"], sp["b_in"])
        for li, lp in enumerate(sp["layers"]):
            h = dilres(h, lp["w3f"], lp["b3"], lp["w1"], lp["b1"], 2 ** li)
        return conv1x1(h, sp["w_out"], sp["b_out"]) * m1

    out = stage(stage_params[0], x)
    outs = [out]
    for sp in stage_params[1:]:
        out = stage(sp, jax.nn.softmax(out, axis=1) * m1)
        outs.append(out)
    return jnp.stack(outs, axis=0)


# ----------------------------------------------------------------------------
# Deterministic synthetic parameters
# ----------------------------------------------------------------------------
def _init_linear(key, cin, cout, scale):
    k1, k2 = jax.random.split(key)
    w = jax.random.normal(k1, (cout, cin), jnp.float32) * scale
    b = jax.random.normal(k2, (cout, 1), jnp.float32) * 0.01
    return w, b


def init_single_stage(key, num_layers, num_f_maps, dim, num_classes):
    keys = jax.random.split(key, 2 + num_layers)
    w_in, b_in = _init_linear(keys[0], dim, num_f_maps, 1.0 / jnp.sqrt(float(dim)))
    layers = []
    for i in range(num_layers):
        k3, k1x1 = jax.random.split(keys[1 + i])
        w3 = jax.random.normal(k3, (3, num_f_maps, num_f_maps), jnp.float32) * (
            1.0 / jnp.sqrt(3.0 * num_f_maps))
        # conv_dilated weight pre-fused to (F, 3F): [W_{t-d} | W_t | W_{t+d}]
        w3f = jnp.concatenate([w3[0], w3[1], w3[2]], axis=1)
        b3 = jnp.zeros((num_f_maps, 1), jnp.float32)
        w1, b1 = _init_linear(k1x1, num_f_maps, num_f_maps,
                              1.0 / jnp.sqrt(float(num_f_maps)))
        layers.append(dict(w3f=w3f, b3=b3, w1=w1, b1=b1))
    w_out, b_out = _init_linear(keys[-1], num_f_maps, num_classes,
                                1.0 / jnp.sqrt(float(num_f_maps)))
    return dict(w_in=w_in, b_in=b_in, layers=layers, w_out=w_out, b_out=b_out)


if __name__ == "__main__":
    NUM_STAGES = 2
    NUM_LAYERS = 3
    NUM_F_MAPS = 16
    INPUT_DIM = 8
    NUM_CLASSES = 8

    N, T = 2, 128   # per-batch lane axis T = 128 (lane-dense)

    key = jax.random.PRNGKey(0)
    k_x, k_p = jax.random.split(key)

    x = jax.random.normal(k_x, (N, INPUT_DIM, T), jnp.float32)
    # single-channel mask: 1 for valid frames, 0 for padding
    valid_len = jnp.array([T, T // 2], dtype=jnp.int32)
    mask = (jnp.arange(T)[None, None, :] < valid_len[:, None, None]).astype(jnp.float32)

    stage_keys = jax.random.split(k_p, NUM_STAGES)
    stage_params = [init_single_stage(stage_keys[0], NUM_LAYERS, NUM_F_MAPS,
                                      INPUT_DIM, NUM_CLASSES)]
    for s in range(NUM_STAGES - 1):
        stage_params.append(init_single_stage(stage_keys[s + 1], NUM_LAYERS,
                                              NUM_F_MAPS, NUM_CLASSES, NUM_CLASSES))

    outputs = jax.block_until_ready(jax.jit(multi_stage_forward)(stage_params, x, mask))
    assert outputs.shape == (NUM_STAGES, N, NUM_CLASSES, T)
    assert bool(jnp.all(jnp.isfinite(outputs)))

    # correctness vs pure-f32 JAX reference (tolerance loosened for bf16 MXU operands)
    ref = _ref_forward(stage_params, x, mask)
    np.testing.assert_allclose(np.asarray(outputs), np.asarray(ref),
                               atol=1e-1, rtol=5e-2)

    print("KERNEL_OK")
</pallas_src>

<mosaic_0001>
module attributes {stable_mosaic.version = 11 : i64} {
  func.func @_ms_tcn_kernel(%arg0: i32, %arg1: memref<1x8x128xf32, #tpu.memory_space<vmem>>, %arg2: memref<1x1x128xf32, #tpu.memory_space<vmem>>, %arg3: memref<6x128xf32, #tpu.memory_space<vmem>>, %arg4: memref<240x48xbf16, #tpu.memory_space<vmem>>, %arg5: memref<16x16xf32, #tpu.memory_space<vmem>>, %arg6: memref<2x1x8x128xf32, #tpu.memory_space<vmem>>) attributes {dimension_semantics = [#tpu.dimension_semantics<parallel>], iteration_bounds = array<i64: 2>, scalar_prefetch = 0 : i64, scratch_operands = 0 : i64, tpu.core_type = #tpu.core_type<tc>, window_params = [{transform_indices = @transform_0, window_bounds = array<i64: 1, 8, 128>}, {transform_indices = @transform_1, window_bounds = array<i64: 1, 1, 128>}, {pipeline_mode = #tpu.pipeline_mode<synchronous>, transform_indices = @transform_2, window_bounds = array<i64: 6, 128>}, {pipeline_mode = #tpu.pipeline_mode<synchronous>, transform_indices = @transform_3, window_bounds = array<i64: 240, 48>}, {pipeline_mode = #tpu.pipeline_mode<synchronous>, transform_indices = @transform_4, window_bounds = array<i64: 16, 16>}, {transform_indices = @transform_5, window_bounds = array<i64: 2, 1, 8, 128>}]} {
    %c0 = arith.constant 0 : index
    %c0_0 = arith.constant 0 : index
    %c0_1 = arith.constant 0 : index
    %0 = vector.load %arg1[%c0, %c0_0, %c0_1] : memref<1x8x128xf32, #tpu.memory_space<vmem>>, vector<1x8x128xf32>
    %1 = vector.shape_cast %0 : vector<1x8x128xf32> to vector<8x128xf32>
    %c0_2 = arith.constant 0 : index
    %c0_3 = arith.constant 0 : index
    %c0_4 = arith.constant 0 : index
    %2 = vector.load %arg2[%c0_2, %c0_3, %c0_4] : memref<1x1x128xf32, #tpu.memory_space<vmem>>, vector<1x1x128xf32>
    %3 = vector.shape_cast %2 : vector<1x1x128xf32> to vector<1x128xf32>
    %c0_5 = arith.constant 0 : index
    %c0_6 = arith.constant 0 : index
    %4 = vector.load %arg3[%c0_5, %c0_6] : memref<6x128xf32, #tpu.memory_space<vmem>>, vector<6x128xf32>
    %c0_7 = arith.constant 0 : index
    %c0_8 = arith.constant 0 : index
    %5 = vector.load %arg4[%c0_7, %c0_8] : memref<240x48xbf16, #tpu.memory_space<vmem>>, vector<16x8xbf16>
    %6 = arith.truncf %1 : vector<8x128xf32> to vector<8x128xbf16>
    %cst = arith.constant dense<0.000000e+00> : vector<16x128xf32>
    %7 = tpu.matmul %5, %6, %cst {dimension_numbers = #tpu.dot_dimension_numbers<[1], [0], [0], [1], [0, 0, 1, 1], [], []>} : vector<16x8xbf16>, vector<8x128xbf16>, vector<16x128xf32> -> vector<16x128xf32>
    %c0_9 = arith.constant 0 : index
    %c0_10 = arith.constant 0 : index
    %8 = vector.load %arg5[%c0_9, %c0_10] : memref<16x16xf32, #tpu.memory_space<vmem>>, vector<16x1xf32>
    %9 = vector.broadcast %8 : vector<16x1xf32> to vector<16x128xf32>
    %10 = arith.addf %7, %9 : vector<16x128xf32>
    %c16 = arith.constant 16 : index
    %c0_11 = arith.constant 0 : index
    %11 = vector.load %arg4[%c16, %c0_11] : memref<240x48xbf16, #tpu.memory_space<vmem>>, vector<16x48xbf16>
    %c0_12 = arith.constant 0 : index
    %c1 = arith.constant 1 : index
    %12 = vector.load %arg5[%c0_12, %c1] : memref<16x16xf32, #tpu.memory_space<vmem>>, vector<16x1xf32>
    %c32 = arith.constant 32 : index
    %c0_13 = arith.constant 0 : index
    %13 = vector.load %arg4[%c32, %c0_13] : memref<240x48xbf16, #tpu.memory_space<vmem>>, vector<16x16xbf16>
    %c0_14 = arith.constant 0 : index
    %c2 = arith.constant 2 : index
    %14 = vector.load %arg5[%c0_14, %c2] : memref<16x16xf32, #tpu.memory_space<vmem>>, vector<16x1xf32>
    %15 = vector.extract_strided_slice %4 {offsets = [0, 0], sizes = [1, 128], strides = [1, 1]} : vector<6x128xf32> to vector<1x128xf32>
    %16 = vector.extract_strided_slice %4 {offsets = [1, 0], sizes = [1, 128], strides = [1, 1]} : vector<6x128xf32> to vector<1x128xf32>
    %c1_i32 = arith.constant 1 : i32
    %17 = tpu.dynamic_rotate %10 by %c1_i32 dim 1 : vector<16x128xf32>, i32 -> vector<16x128xf32>
    %18 = vector.broadcast %15 : vector<1x128xf32> to vector<16x128xf32>
    %19 = arith.mulf %17, %18 : vector<16x128xf32>
    %c127_i32 = arith.constant 127 : i32
    %20 = tpu.dynamic_rotate %10 by %c127_i32 dim 1 : vector<16x128xf32>, i32 -> vector<16x128xf32>
    %21 = vector.broadcast %16 : vector<1x128xf32> to vector<16x128xf32>
    %22 = arith.mulf %20, %21 : vector<16x128xf32>
    %23 = tpu.concatenate %19, %10, %22 in 0 : vector<16x128xf32>, vector<16x128xf32>, vector<16x128xf32> -> vector<48x128xf32>
    %24 = arith.truncf %23 : vector<48x128xf32> to vector<48x128xbf16>
    %cst_15 = arith.constant dense<0.000000e+00> : vector<16x128xf32>
    %25 = tpu.matmul %11, %24, %cst_15 {dimension_numbers = #tpu.dot_dimension_numbers<[1], [0], [0], [1], [0, 0, 1, 1], [], []>} : vector<16x48xbf16>, vector<48x128xbf16>, vector<16x128xf32> -> vector<16x128xf32>
    %26 = vector.broadcast %12 : vector<16x1xf32> to vector<16x128xf32>
    %27 = arith.addf %25, %26 : vector<16x128xf32>
    %cst_16 = arith.constant 0.000000e+00 : f32
    %28 = vector.broadcast %cst_16 : f32 to vector<16x128xf32>
    %29 = arith.maximumf %27, %28 : vector<16x128xf32>
    %30 = arith.truncf %29 : vector<16x128xf32> to vector<16x128xbf16>
    %cst_17 = arith.constant dense<0.000000e+00> : vector<16x128xf32>
    %31 = tpu.matmul %13, %30, %cst_17 {dimension_numbers = #tpu.dot_dimension_numbers<[1], [0], [0], [1], [0, 0, 1, 1], [], []>} : vector<16x16xbf16>, vector<16x128xbf16>, vector<16x128xf32> -> vector<16x128xf32>
    %32 = vector.broadcast %14 : vector<16x1xf32> to vector<16x128xf32>
    %33 = arith.addf %31, %32 : vector<16x128xf32>
    %34 = arith.addf %10, %33 : vector<16x128xf32>
    %35 = vector.broadcast %3 : vector<1x128xf32> to vector<16x128xf32>
    %36 = arith.mulf %34, %35 : vector<16x128xf32>
    %c48 = arith.constant 48 : index
    %c0_18 = arith.constant 0 : index
    %37 = vector.load %arg4[%c48, %c0_18] : memref<240x48xbf16, #tpu.memory_space<vmem>>, vector<16x48xbf16>
    %c0_19 = arith.constant 0 : index
    %c3 = arith.constant 3 : index
    %38 = vector.load %arg5[%c0_19, %c3] : memref<16x16xf32, #tpu.memory_space<vmem>>, vector<16x1xf32>
    %c64 = arith.constant 64 : index
    %c0_20 = arith.constant 0 : index
    %39 = vector.load %arg4[%c64, %c0_20] : memref<240x48xbf16, #tpu.memory_space<vmem>>, vector<16x16xbf16>
    %c0_21 = arith.constant 0 : index
    %c4 = arith.constant 4 : index
    %40 = vector.load %arg5[%c0_21, %c4] : memref<16x16xf32, #tpu.memory_space<vmem>>, vector<16x1xf32>
    %41 = vector.extract_strided_slice %4 {offsets = [2, 0], sizes = [1, 128], strides = [1, 1]} : vector<6x128xf32> to vector<1x128xf32>
    %42 = vector.extract_strided_slice %4 {offsets = [3, 0], sizes = [1, 128], strides = [1, 1]} : vector<6x128xf32> to vector<1x128xf32>
    %c2_i32 = arith.constant 2 : i32
    %43 = tpu.dynamic_rotate %36 by %c2_i32 dim 1 : vector<16x128xf32>, i32 -> vector<16x128xf32>
    %44 = vector.broadcast %41 : vector<1x128xf32> to vector<16x128xf32>
    %45 = arith.mulf %43, %44 : vector<16x128xf32>
    %c126_i32 = arith.constant 126 : i32
    %46 = tpu.dynamic_rotate %36 by %c126_i32 dim 1 : vector<16x128xf32>, i32 -> vector<16x128xf32>
    %47 = vector.broadcast %42 : vector<1x128xf32> to vector<16x128xf32>
    %48 = arith.mulf %46, %47 : vector<16x128xf32>
    %49 = tpu.concatenate %45, %36, %48 in 0 : vector<16x128xf32>, vector<16x128xf32>, vector<16x128xf32> -> vector<48x128xf32>
    %50 = arith.truncf %49 : vector<48x128xf32> to vector<48x128xbf16>
    %cst_22 = arith.constant dense<0.000000e+00> : vector<16x128xf32>
    %51 = tpu.matmul %37, %50, %cst_22 {dimension_numbers = #tpu.dot_dimension_numbers<[1], [0], [0], [1], [0, 0, 1, 1], [], []>} : vector<16x48xbf16>, vector<48x128xbf16>, vector<16x128xf32> -> vector<16x128xf32>
    %52 = vector.broadcast %38 : vector<16x1xf32> to vector<16x128xf32>
    %53 = arith.addf %51, %52 : vector<16x128xf32>
    %cst_23 = arith.constant 0.000000e+00 : f32
    %54 = vector.broadcast %cst_23 : f32 to vector<16x128xf32>
    %55 = arith.maximumf %53, %54 : vector<16x128xf32>
    %56 = arith.truncf %55 : vector<16x128xf32> to vector<16x128xbf16>
    %cst_24 = arith.constant dense<0.000000e+00> : vector<16x128xf32>
    %57 = tpu.matmul %39, %56, %cst_24 {dimension_numbers = #tpu.dot_dimension_numbers<[1], [0], [0], [1], [0, 0, 1, 1], [], []>} : vector<16x16xbf16>, vector<16x128xbf16>, vector<16x128xf32> -> vector<16x128xf32>
    %58 = vector.broadcast %40 : vector<16x1xf32> to vector<16x128xf32>
    %59 = arith.addf %57, %58 : vector<16x128xf32>
    %60 = arith.addf %36, %59 : vector<16x128xf32>
    %61 = vector.broadcast %3 : vector<1x128xf32> to vector<16x128xf32>
    %62 = arith.mulf %60, %61 : vector<16x128xf32>
    %c80 = arith.constant 80 : index
    %c0_25 = arith.constant 0 : index
    %63 = vector.load %arg4[%c80, %c0_25] : memref<240x48xbf16, #tpu.memory_space<vmem>>, vector<16x48xbf16>
    %c0_26 = arith.constant 0 : index
    %c5 = arith.constant 5 : index
    %64 = vector.load %arg5[%c0_26, %c5] : memref<16x16xf32, #tpu.memory_space<vmem>>, vector<16x1xf32>
    %c96 = arith.constant 96 : index
    %c0_27 = arith.constant 0 : index
    %65 = vector.load %arg4[%c96, %c0_27] : memref<240x48xbf16, #tpu.memory_space<vmem>>, vector<16x16xbf16>
    %c0_28 = arith.constant 0 : index
    %c6 = arith.constant 6 : index
    %66 = vector.load %arg5[%c0_28, %c6] : memref<16x16xf32, #tpu.memory_space<vmem>>, vector<16x1xf32>
    %67 = vector.extract_strided_slice %4 {offsets = [4, 0], sizes = [1, 128], strides = [1, 1]} : vector<6x128xf32> to vector<1x128xf32>
    %68 = vector.extract_strided_slice %4 {offsets = [5, 0], sizes = [1, 128], strides = [1, 1]} : vector<6x128xf32> to vector<1x128xf32>
    %c4_i32 = arith.constant 4 : i32
    %69 = tpu.dynamic_rotate %62 by %c4_i32 dim 1 : vector<16x128xf32>, i32 -> vector<16x128xf32>
    %70 = vector.broadcast %67 : vector<1x128xf32> to vector<16x128xf32>
    %71 = arith.mulf %69, %70 : vector<16x128xf32>
    %c124_i32 = arith.constant 124 : i32
    %72 = tpu.dynamic_rotate %62 by %c124_i32 dim 1 : vector<16x128xf32>, i32 -> vector<16x128xf32>
    %73 = vector.broadcast %68 : vector<1x128xf32> to vector<16x128xf32>
    %74 = arith.mulf %72, %73 : vector<16x128xf32>
    %75 = tpu.concatenate %71, %62, %74 in 0 : vector<16x128xf32>, vector<16x128xf32>, vector<16x128xf32> -> vector<48x128xf32>
    %76 = arith.truncf %75 : vector<48x128xf32> to vector<48x128xbf16>
    %cst_29 = arith.constant dense<0.000000e+00> : vector<16x128xf32>
    %77 = tpu.matmul %63, %76, %cst_29 {dimension_numbers = #tpu.dot_dimension_numbers<[1], [0], [0], [1], [0, 0, 1, 1], [], []>} : vector<16x48xbf16>, vector<48x128xbf16>, vector<16x128xf32> -> vector<16x128xf32>
    %78 = vector.broadcast %64 : vector<16x1xf32> to vector<16x128xf32>
    %79 = arith.addf %77, %78 : vector<16x128xf32>
    %cst_30 = arith.constant 0.000000e+00 : f32
    %80 = vector.broadcast %cst_30 : f32 to vector<16x128xf32>
    %81 = arith.maximumf %79, %80 : vector<16x128xf32>
    %82 = arith.truncf %81 : vector<16x128xf32> to vector<16x128xbf16>
    %cst_31 = arith.constant dense<0.000000e+00> : vector<16x128xf32>
    %83 = tpu.matmul %65, %82, %cst_31 {dimension_numbers = #tpu.dot_dimension_numbers<[1], [0], [0], [1], [0, 0, 1, 1], [], []>} : vector<16x16xbf16>, vector<16x128xbf16>, vector<16x128xf32> -> vector<16x128xf32>
    %84 = vector.broadcast %66 : vector<16x1xf32> to vector<16x128xf32>
    %85 = arith.addf %83, %84 : vector<16x128xf32>
    %86 = arith.addf %62, %85 : vector<16x128xf32>
    %87 = vector.broadcast %3 : vector<1x128xf32> to vector<16x128xf32>
    %88 = arith.mulf %86, %87 : vector<16x128xf32>
    %c112 = arith.constant 112 : index
    %c0_32 = arith.constant 0 : index
    %89 = vector.load %arg4[%c112, %c0_32] : memref<240x48xbf16, #tpu.memory_space<vmem>>, vector<8x16xbf16>
    %90 = arith.truncf %88 : vector<16x128xf32> to vector<16x128xbf16>
    %cst_33 = arith.constant dense<0.000000e+00> : vector<8x128xf32>
    %91 = tpu.matmul %89, %90, %cst_33 {dimension_numbers = #tpu.dot_dimension_numbers<[1], [0], [0], [1], [0, 0, 1, 1], [], []>} : vector<8x16xbf16>, vector<16x128xbf16>, vector<8x128xf32> -> vector<8x128xf32>
    %c0_34 = arith.constant 0 : index
    %c7 = arith.constant 7 : index
    %92 = vector.load %arg5[%c0_34, %c7] : memref<16x16xf32, #tpu.memory_space<vmem>>, vector<8x1xf32>
    %93 = vector.broadcast %92 : vector<8x1xf32> to vector<8x128xf32>
    %94 = arith.addf %91, %93 : vector<8x128xf32>
    %95 = vector.broadcast %3 : vector<1x128xf32> to vector<8x128xf32>
    %96 = arith.mulf %94, %95 : vector<8x128xf32>
    %c0_35 = arith.constant 0 : index
    %c0_36 = arith.constant 0 : index
    %c0_37 = arith.constant 0 : index
    %c0_38 = arith.constant 0 : index
    %97 = vector.load %arg6[%c0_35, %c0_36, %c0_37, %c0_38] : memref<2x1x8x128xf32, #tpu.memory_space<vmem>>, vector<1x1x8x128xf32>
    %98 = vector.shape_cast %97 : vector<1x1x8x128xf32> to vector<8x128xf32>
    %99 = vector.shape_cast %96 : vector<8x128xf32> to vector<1x1x8x128xf32>
    tpu.vector_store %arg6[%c0_35, %c0_36, %c0_37, %c0_38], %99 {strides = array<i32>} : memref<2x1x8x128xf32, #tpu.memory_space<vmem>>, vector<1x1x8x128xf32>,
    %cst_39 = arith.constant dense<0xFF800000> : vector<128xf32>
    %100 = vector.multi_reduction <maximumf>, %96, %cst_39 [0] : vector<8x128xf32> to vector<128xf32>
    %101 = vector.shape_cast %100 : vector<128xf32> to vector<1x128xf32>
    %102 = vector.broadcast %101 : vector<1x128xf32> to vector<8x128xf32>
    %103 = arith.subf %96, %102 : vector<8x128xf32>
    %104 = math.exp %103 : vector<8x128xf32>
    %cst_40 = arith.constant dense<0.000000e+00> : vector<128xf32>
    %105 = vector.multi_reduction <add>, %104, %cst_40 [0] : vector<8x128xf32> to vector<128xf32>
    %106 = vector.shape_cast %105 : vector<128xf32> to vector<1x128xf32>
    %107 = vector.broadcast %106 : vector<1x128xf32> to vector<8x128xf32>
    %108 = arith.divf %104, %107 : vector<8x128xf32>
    %109 = vector.broadcast %3 : vector<1x128xf32> to vector<8x128xf32>
    %110 = arith.mulf %108, %109 : vector<8x128xf32>
    %c120 = arith.constant 120 : index
    %c0_41 = arith.constant 0 : index
    %111 = vector.load %arg4[%c120, %c0_41] : memref<240x48xbf16, #tpu.memory_space<vmem>>, vector<16x8xbf16>
    %112 = arith.truncf %110 : vector<8x128xf32> to vector<8x128xbf16>
    %cst_42 = arith.constant dense<0.000000e+00> : vector<16x128xf32>
    %113 = tpu.matmul %111, %112, %cst_42 {dimension_numbers = #tpu.dot_dimension_numbers<[1], [0], [0], [1], [0, 0, 1, 1], [], []>} : vector<16x8xbf16>, vector<8x128xbf16>, vector<16x128xf32> -> vector<16x128xf32>
    %c0_43 = arith.constant 0 : index
    %c8 = arith.constant 8 : index
    %114 = vector.load %arg5[%c0_43, %c8] : memref<16x16xf32, #tpu.memory_space<vmem>>, vector<16x1xf32>
    %115 = vector.broadcast %114 : vector<16x1xf32> to vector<16x128xf32>
    %116 = arith.addf %113, %115 : vector<16x128xf32>
    %c136 = arith.constant 136 : index
    %c0_44 = arith.constant 0 : index
    %117 = vector.load %arg4[%c136, %c0_44] : memref<240x48xbf16, #tpu.memory_space<vmem>>, vector<16x48xbf16>
    %c0_45 = arith.constant 0 : index
    %c9 = arith.constant 9 : index
    %118 = vector.load %arg5[%c0_45, %c9] : memref<16x16xf32, #tpu.memory_space<vmem>>, vector<16x1xf32>
    %c152 = arith.constant 152 : index
    %c0_46 = arith.constant 0 : index
    %119 = vector.load %arg4[%c152, %c0_46] : memref<240x48xbf16, #tpu.memory_space<vmem>>, vector<16x16xbf16>
    %c0_47 = arith.constant 0 : index
    %c10 = arith.constant 10 : index
    %120 = vector.load %arg5[%c0_47, %c10] : memref<16x16xf32, #tpu.memory_space<vmem>>, vector<16x1xf32>
    %121 = vector.extract_strided_slice %4 {offsets = [0, 0], sizes = [1, 128], strides = [1, 1]} : vector<6x128xf32> to vector<1x128xf32>
    %122 = vector.extract_strided_slice %4 {offsets = [1, 0], sizes = [1, 128], strides = [1, 1]} : vector<6x128xf32> to vector<1x128xf32>
    %c1_i32_48 = arith.constant 1 : i32
    %123 = tpu.dynamic_rotate %116 by %c1_i32_48 dim 1 : vector<16x128xf32>, i32 -> vector<16x128xf32>
    %124 = vector.broadcast %121 : vector<1x128xf32> to vector<16x128xf32>
    %125 = arith.mulf %123, %124 : vector<16x128xf32>
    %c127_i32_49 = arith.constant 127 : i32
    %126 = tpu.dynamic_rotate %116 by %c127_i32_49 dim 1 : vector<16x128xf32>, i32 -> vector<16x128xf32>
    %127 = vector.broadcast %122 : vector<1x128xf32> to vector<16x128xf32>
    %128 = arith.mulf %126, %127 : vector<16x128xf32>
    %129 = tpu.concatenate %125, %116, %128 in 0 : vector<16x128xf32>, vector<16x128xf32>, vector<16x128xf32> -> vector<48x128xf32>
    %130 = arith.truncf %129 : vector<48x128xf32> to vector<48x128xbf16>
    %cst_50 = arith.constant dense<0.000000e+00> : vector<16x128xf32>
    %131 = tpu.matmul %117, %130, %cst_50 {dimension_numbers = #tpu.dot_dimension_numbers<[1], [0], [0], [1], [0, 0, 1, 1], [], []>} : vector<16x48xbf16>, vector<48x128xbf16>, vector<16x128xf32> -> vector<16x128xf32>
    %132 = vector.broadcast %118 : vector<16x1xf32> to vector<16x128xf32>
    %133 = arith.addf %131, %132 : vector<16x128xf32>
    %cst_51 = arith.constant 0.000000e+00 : f32
    %134 = vector.broadcast %cst_51 : f32 to vector<16x128xf32>
    %135 = arith.maximumf %133, %134 : vector<16x128xf32>
    %136 = arith.truncf %135 : vector<16x128xf32> to vector<16x128xbf16>
    %cst_52 = arith.constant dense<0.000000e+00> : vector<16x128xf32>
    %137 = tpu.matmul %119, %136, %cst_52 {dimension_numbers = #tpu.dot_dimension_numbers<[1], [0], [0], [1], [0, 0, 1, 1], [], []>} : vector<16x16xbf16>, vector<16x128xbf16>, vector<16x128xf32> -> vector<16x128xf32>
    %138 = vector.broadcast %120 : vector<16x1xf32> to vector<16x128xf32>
    %139 = arith.addf %137, %138 : vector<16x128xf32>
    %140 = arith.addf %116, %139 : vector<16x128xf32>
    %141 = vector.broadcast %3 : vector<1x128xf32> to vector<16x128xf32>
    %142 = arith.mulf %140, %141 : vector<16x128xf32>
    %c168 = arith.constant 168 : index
    %c0_53 = arith.constant 0 : index
    %143 = vector.load %arg4[%c168, %c0_53] : memref<240x48xbf16, #tpu.memory_space<vmem>>, vector<16x48xbf16>
    %c0_54 = arith.constant 0 : index
    %c11 = arith.constant 11 : index
    %144 = vector.load %arg5[%c0_54, %c11] : memref<16x16xf32, #tpu.memory_space<vmem>>, vector<16x1xf32>
    %c184 = arith.constant 184 : index
    %c0_55 = arith.constant 0 : index
    %145 = vector.load %arg4[%c184, %c0_55] : memref<240x48xbf16, #tpu.memory_space<vmem>>, vector<16x16xbf16>
    %c0_56 = arith.constant 0 : index
    %c12 = arith.constant 12 : index
    %146 = vector.load %arg5[%c0_56, %c12] : memref<16x16xf32, #tpu.memory_space<vmem>>, vector<16x1xf32>
    %147 = vector.extract_strided_slice %4 {offsets = [2, 0], sizes = [1, 128], strides = [1, 1]} : vector<6x128xf32> to vector<1x128xf32>
    %148 = vector.extract_strided_slice %4 {offsets = [3, 0], sizes = [1, 128], strides = [1, 1]} : vector<6x128xf32> to vector<1x128xf32>
    %c2_i32_57 = arith.constant 2 : i32
    %149 = tpu.dynamic_rotate %142 by %c2_i32_57 dim 1 : vector<16x128xf32>, i32 -> vector<16x128xf32>
    %150 = vector.broadcast %147 : vector<1x128xf32> to vector<16x128xf32>
    %151 = arith.mulf %149, %150 : vector<16x128xf32>
    %c126_i32_58 = arith.constant 126 : i32
    %152 = tpu.dynamic_rotate %142 by %c126_i32_58 dim 1 : vector<16x128xf32>, i32 -> vector<16x128xf32>
    %153 = vector.broadcast %148 : vector<1x128xf32> to vector<16x128xf32>
    %154 = arith.mulf %152, %153 : vector<16x128xf32>
    %155 = tpu.concatenate %151, %142, %154 in 0 : vector<16x128xf32>, vector<16x128xf32>, vector<16x128xf32> -> vector<48x128xf32>
    %156 = arith.truncf %155 : vector<48x128xf32> to vector<48x128xbf16>
    %cst_59 = arith.constant dense<0.000000e+00> : vector<16x128xf32>
    %157 = tpu.matmul %143, %156, %cst_59 {dimension_numbers = #tpu.dot_dimension_numbers<[1], [0], [0], [1], [0, 0, 1, 1], [], []>} : vector<16x48xbf16>, vector<48x128xbf16>, vector<16x128xf32> -> vector<16x128xf32>
    %158 = vector.broadcast %144 : vector<16x1xf32> to vector<16x128xf32>
    %159 = arith.addf %157, %158 : vector<16x128xf32>
    %cst_60 = arith.constant 0.000000e+00 : f32
    %160 = vector.broadcast %cst_60 : f32 to vector<16x128xf32>
    %161 = arith.maximumf %159, %160 : vector<16x128xf32>
    %162 = arith.truncf %161 : vector<16x128xf32> to vector<16x128xbf16>
    %cst_61 = arith.constant dense<0.000000e+00> : vector<16x128xf32>
    %163 = tpu.matmul %145, %162, %cst_61 {dimension_numbers = #tpu.dot_dimension_numbers<[1], [0], [0], [1], [0, 0, 1, 1], [], []>} : vector<16x16xbf16>, vector<16x128xbf16>, vector<16x128xf32> -> vector<16x128xf32>
    %164 = vector.broadcast %146 : vector<16x1xf32> to vector<16x128xf32>
    %165 = arith.addf %163, %164 : vector<16x128xf32>
    %166 = arith.addf %142, %165 : vector<16x128xf32>
    %167 = vector.broadcast %3 : vector<1x128xf32> to vector<16x128xf32>
    %168 = arith.mulf %166, %167 : vector<16x128xf32>
    %c200 = arith.constant 200 : index
    %c0_62 = arith.constant 0 : index
    %169 = vector.load %arg4[%c200, %c0_62] : memref<240x48xbf16, #tpu.memory_space<vmem>>, vector<16x48xbf16>
    %c0_63 = arith.constant 0 : index
    %c13 = arith.constant 13 : index
    %170 = vector.load %arg5[%c0_63, %c13] : memref<16x16xf32, #tpu.memory_space<vmem>>, vector<16x1xf32>
    %c216 = arith.constant 216 : index
    %c0_64 = arith.constant 0 : index
    %171 = vector.load %arg4[%c216, %c0_64] : memref<240x48xbf16, #tpu.memory_space<vmem>>, vector<16x16xbf16>
    %c0_65 = arith.constant 0 : index
    %c14 = arith.constant 14 : index
    %172 = vector.load %arg5[%c0_65, %c14] : memref<16x16xf32, #tpu.memory_space<vmem>>, vector<16x1xf32>
    %173 = vector.extract_strided_slice %4 {offsets = [4, 0], sizes = [1, 128], strides = [1, 1]} : vector<6x128xf32> to vector<1x128xf32>
    %174 = vector.extract_strided_slice %4 {offsets = [5, 0], sizes = [1, 128], strides = [1, 1]} : vector<6x128xf32> to vector<1x128xf32>
    %c4_i32_66 = arith.constant 4 : i32
    %175 = tpu.dynamic_rotate %168 by %c4_i32_66 dim 1 : vector<16x128xf32>, i32 -> vector<16x128xf32>
    %176 = vector.broadcast %173 : vector<1x128xf32> to vector<16x128xf32>
    %177 = arith.mulf %175, %176 : vector<16x128xf32>
    %c124_i32_67 = arith.constant 124 : i32
    %178 = tpu.dynamic_rotate %168 by %c124_i32_67 dim 1 : vector<16x128xf32>, i32 -> vector<16x128xf32>
    %179 = vector.broadcast %174 : vector<1x128xf32> to vector<16x128xf32>
    %180 = arith.mulf %178, %179 : vector<16x128xf32>
    %181 = tpu.concatenate %177, %168, %180 in 0 : vector<16x128xf32>, vector<16x128xf32>, vector<16x128xf32> -> vector<48x128xf32>
    %182 = arith.truncf %181 : vector<48x128xf32> to vector<48x128xbf16>
    %cst_68 = arith.constant dense<0.000000e+00> : vector<16x128xf32>
    %183 = tpu.matmul %169, %182, %cst_68 {dimension_numbers = #tpu.dot_dimension_numbers<[1], [0], [0], [1], [0, 0, 1, 1], [], []>} : vector<16x48xbf16>, vector<48x128xbf16>, vector<16x128xf32> -> vector<16x128xf32>
    %184 = vector.broadcast %170 : vector<16x1xf32> to vector<16x128xf32>
    %185 = arith.addf %183, %184 : vector<16x128xf32>
    %cst_69 = arith.constant 0.000000e+00 : f32
    %186 = vector.broadcast %cst_69 : f32 to vector<16x128xf32>
    %187 = arith.maximumf %185, %186 : vector<16x128xf32>
    %188 = arith.truncf %187 : vector<16x128xf32> to vector<16x128xbf16>
    %cst_70 = arith.constant dense<0.000000e+00> : vector<16x128xf32>
    %189 = tpu.matmul %171, %188, %cst_70 {dimension_numbers = #tpu.dot_dimension_numbers<[1], [0], [0], [1], [0, 0, 1, 1], [], []>} : vector<16x16xbf16>, vector<16x128xbf16>, vector<16x128xf32> -> vector<16x128xf32>
    %190 = vector.broadcast %172 : vector<16x1xf32> to vector<16x128xf32>
    %191 = arith.addf %189, %190 : vector<16x128xf32>
    %192 = arith.addf %168, %191 : vector<16x128xf32>
    %193 = vector.broadcast %3 : vector<1x128xf32> to vector<16x128xf32>
    %194 = arith.mulf %192, %193 : vector<16x128xf32>
    %c232 = arith.constant 232 : index
    %c0_71 = arith.constant 0 : index
    %195 = vector.load %arg4[%c232, %c0_71] : memref<240x48xbf16, #tpu.memory_space<vmem>>, vector<8x16xbf16>
    %196 = arith.truncf %194 : vector<16x128xf32> to vector<16x128xbf16>
    %cst_72 = arith.constant dense<0.000000e+00> : vector<8x128xf32>
    %197 = tpu.matmul %195, %196, %cst_72 {dimension_numbers = #tpu.dot_dimension_numbers<[1], [0], [0], [1], [0, 0, 1, 1], [], []>} : vector<8x16xbf16>, vector<16x128xbf16>, vector<8x128xf32> -> vector<8x128xf32>
    %c0_73 = arith.constant 0 : index
    %c15 = arith.constant 15 : index
    %198 = vector.load %arg5[%c0_73, %c15] : memref<16x16xf32, #tpu.memory_space<vmem>>, vector<8x1xf32>
    %199 = vector.broadcast %198 : vector<8x1xf32> to vector<8x128xf32>
    %200 = arith.addf %197, %199 : vector<8x128xf32>
    %201 = vector.broadcast %3 : vector<1x128xf32> to vector<8x128xf32>
    %202 = arith.mulf %200, %201 : vector<8x128xf32>
    %c1_74 = arith.constant 1 : index
    %c0_75 = arith.constant 0 : index
    %c0_76 = arith.constant 0 : index
    %c0_77 = arith.constant 0 : index
    %203 = vector.load %arg6[%c1_74, %c0_75, %c0_76, %c0_77] : memref<2x1x8x128xf32, #tpu.memory_space<vmem>>, vector<1x1x8x128xf32>
    %204 = vector.shape_cast %203 : vector<1x1x8x128xf32> to vector<8x128xf32>
    %205 = vector.shape_cast %202 : vector<8x128xf32> to vector<1x1x8x128xf32>
    tpu.vector_store %arg6[%c1_74, %c0_75, %c0_76, %c0_77], %205 {strides = array<i32>} : memref<2x1x8x128xf32, #tpu.memory_space<vmem>>, vector<1x1x8x128xf32>,
    return
  }
  func.func @transform_0(%arg0: i32) -> (i32, i32, i32) {
    %c0_i32 = arith.constant 0 : i32
    %c0_i32_0 = arith.constant 0 : i32
    %c0_i32_1 = arith.constant 0 : i32
    return %arg0, %c0_i32, %c0_i32_0 : i32, i32, i32
  }
  func.func @transform_1(%arg0: i32) -> (i32, i32, i32) {
    %c0_i32 = arith.constant 0 : i32
    %c0_i32_0 = arith.constant 0 : i32
    %c0_i32_1 = arith.constant 0 : i32
    return %arg0, %c0_i32, %c0_i32_0 : i32, i32, i32
  }
  func.func @transform_2(%arg0: i32) -> (i32, i32) {
    %c0_i32 = arith.constant 0 : i32
    %c0_i32_0 = arith.constant 0 : i32
    %c0_i32_1 = arith.constant 0 : i32
    return %c0_i32, %c0_i32_0 : i32, i32
  }
  func.func @transform_3(%arg0: i32) -> (i32, i32) {
    %c0_i32 = arith.constant 0 : i32
    %c0_i32_0 = arith.constant 0 : i32
    %c0_i32_1 = arith.constant 0 : i32
    return %c0_i32, %c0_i32_0 : i32, i32
  }
  func.func @transform_4(%arg0: i32) -> (i32, i32) {
    %c0_i32 = arith.constant 0 : i32
    %c0_i32_0 = arith.constant 0 : i32
    %c0_i32_1 = arith.constant 0 : i32
    return %c0_i32, %c0_i32_0 : i32, i32
  }
  func.func @transform_5(%arg0: i32) -> (i32, i32, i32, i32) {
    %c0_i32 = arith.constant 0 : i32
    %c0_i32_0 = arith.constant 0 : i32
    %c0_i32_1 = arith.constant 0 : i32
    %c0_i32_2 = arith.constant 0 : i32
    return %c0_i32, %arg0, %c0_i32_0, %c0_i32_1 : i32, i32, i32, i32
  }
}

</mosaic_0001>

<llo_original>
// kernel: multi_stage_forward.1
$region0: #{multi_stage_forward.1}
  #allocation0 [shape = 'u32[]', space=smem, size = 0x4, offset = 0x4, fixed_abs, tag = 'smem constant byte address 0x4 - core index']
  #allocation1 [shape = 'u32[144,128]{1,0:T(1,128)}', space=vmem, size = 0x12000, scoped, tag = 'internal scratch']
  %s0 = inlined_call_operand.vmem [shape: f32[2,8,128], index: 0, kind: input, shape index: {}]
  %s1 = inlined_call_operand.vmem [shape: f32[2,1,128], index: 1, kind: input, shape index: {}]
  %s2 = inlined_call_operand.vmem [shape: f32[6,128], index: 2, kind: input, shape index: {}]
  %s3 = inlined_call_operand.vmem [shape: bf16[240,48], index: 3, kind: input, shape index: {}]
  %s4 = inlined_call_operand.vmem [shape: f32[16,16], index: 4, kind: input, shape index: {}]
  %s5 = inlined_call_operand.hbm [shape: f32[2,2,8,128], index: 5, kind: output, shape index: {}]
  %s6 = sld [smem:[#allocation0]]
  $region53: #{multi_stage_forward.1} parent=0
    _
  %s8 = ssub.s32 1, %s6
  %s9 = scalar_select 0, %s8, %s6
  $region1: #{multi_stage_forward.1} parent=0
    #allocation2 [shape = 'u8[16384]{0}', space=vmem, size = 0x4000, scoped, tag = 'output window, operand 0']
    #allocation3 [shape = 's32[2]{0}', space=sflag, size = 0x8, scoped, tag = 'scoped memory for multi_stage_forward.1']
    %10 = vsyncpa [#allocation3], 0
    %s11 = scalar_lea.sflag [#allocation3], 1
    %12 = vsyncpa %s11, 0
    loop: start=0, step=1, limit=4
    $region2: #{multi_stage_forward.1} parent=1 // loop_pre_header
      _
    $region3: #{multi_stage_forward.1} parent=1 // loop_header
      %s14 = sphi 0, %s18
      %p15 = scmp.ge.s32.totalorder %s14, 4
      %s24 = sphi 0, %s26
      %s27 = sphi 0, %s24
      %s28 = sphi 0, %s27
      %s44 = sphi 0, %s28
      %s50 = sphi 0, %s52
      %s53 = sphi 0, %s50
      %s54 = sphi 0, %s53
      %s70 = sphi 0, %s54
      %s74 = sphi 0, %s74
      %s76 = sphi 0, %s74
      %s77 = sphi 0, %s76
      %s91 = sphi 0, %s77
      %s95 = sphi 0, %s95
      %s97 = sphi 0, %s95
      %s98 = sphi 0, %s97
      %s112 = sphi 0, %s98
      %s116 = sphi 0, %s116
      %s118 = sphi 0, %s116
      %s119 = sphi 0, %s118
      %s133 = sphi 0, %s119
      %s139 = sphi 0, %s141
      %s142 = sphi 0, %s139
      %s143 = sphi 0, %s142
      %s159 = sphi 0, %s143
    $region4: #{multi_stage_forward.1} parent=1 // loop_header_branch
      %17 = sbr.rel (%p15) target = $region8
    $region5: #{multi_stage_forward.1} parent=1 // loop_body
      %s19 = ssub.s32 %s14, 1
      %s20 = ssub.s32 %s14, 2
      %s21 = sadd.s32 %s14, 1
      %s22 = ssub.s32 %s14, %s21
      %p23 = scmp.eq.s32.totalorder %s22, 0
      %s25 = sadd.s32 %s24, 1
      %s26 = scalar_select %p23, %s24, %s25
      %p29 = pneg %p23
      %p30 = scmp.eq.s32.totalorder %s14, 1
      %p31 = por %p29, %p30
      %p32 = scmp.ne.s32.totalorder %s24, %s27
      %p33 = scmp.eq.s32.totalorder %s14, 0
      %p34 = por %p32, %p33
      %p35 = scmp.ne.s32.totalorder %s24, %s27
      %p36 = scmp.eq.s32.totalorder %s19, 1
      %p37 = por %p35, %p36
      %p38 = scmp.ne.s32.totalorder %s27, %s28
      %p39 = scmp.eq.s32.totalorder %s19, 0
      %p40 = por %p38, %p39
      %p41 = scmp.ne.s32.totalorder %s27, %s28
      %p42 = scmp.eq.s32.totalorder %s20, 1
      %p43 = por %p41, %p42
      %p45 = scmp.ne.s32.totalorder %s28, %s44
      %p46 = scmp.eq.s32.totalorder %s20, 0
      %p47 = por %p45, %p46
      %s48 = ssub.s32 %s14, %s21
      %p49 = scmp.eq.s32.totalorder %s48, 0
      %s51 = sadd.s32 %s50, 1
      %s52 = scalar_select %p49, %s50, %s51
      %p55 = pneg %p49
      %p56 = scmp.eq.s32.totalorder %s14, 1
      %p57 = por %p55, %p56
      %p58 = scmp.ne.s32.totalorder %s50, %s53
      %p59 = scmp.eq.s32.totalorder %s14, 0
      %p60 = por %p58, %p59
      %p61 = scmp.ne.s32.totalorder %s50, %s53
      %p62 = scmp.eq.s32.totalorder %s19, 1
      %p63 = por %p61, %p62
      %p64 = scmp.ne.s32.totalorder %s53, %s54
      %p65 = scmp.eq.s32.totalorder %s19, 0
      %p66 = por %p64, %p65
      %p67 = scmp.ne.s32.totalorder %s53, %s54
      %p68 = scmp.eq.s32.totalorder %s20, 1
      %p69 = por %p67, %p68
      %p71 = scmp.ne.s32.totalorder %s54, %s70
      %p72 = scmp.eq.s32.totalorder %s20, 0
      %p73 = por %p71, %p72
      %s75 = sadd.s32 %s74, 1
      %p78 = scmp.eq.s32.totalorder %s14, 1
      %p79 = scmp.ne.s32.totalorder %s74, %s76
      %p80 = scmp.eq.s32.totalorder %s14, 0
      %p81 = por %p79, %p80
      %p82 = scmp.ne.s32.totalorder %s74, %s76
      %p83 = scmp.eq.s32.totalorder %s19, 1
      %p84 = por %p82, %p83
      %p85 = scmp.ne.s32.totalorder %s76, %s77
      %p86 = scmp.eq.s32.totalorder %s19, 0
      %p87 = por %p85, %p86
      %p88 = scmp.ne.s32.totalorder %s76, %s77
      %p89 = scmp.eq.s32.totalorder %s20, 1
      %p90 = por %p88, %p89
      %p92 = scmp.ne.s32.totalorder %s77, %s91
      %p93 = scmp.eq.s32.totalorder %s20, 0
      %p94 = por %p92, %p93
      %s96 = sadd.s32 %s95, 1
      %p99 = scmp.eq.s32.totalorder %s14, 1
      %p100 = scmp.ne.s32.totalorder %s95, %s97
      %p101 = scmp.eq.s32.totalorder %s14, 0
      %p102 = por %p100, %p101
      %p103 = scmp.ne.s32.totalorder %s95, %s97
      %p104 = scmp.eq.s32.totalorder %s19, 1
      %p105 = por %p103, %p104
      %p106 = scmp.ne.s32.totalorder %s97, %s98
      %p107 = scmp.eq.s32.totalorder %s19, 0
      %p108 = por %p106, %p107
      %p109 = scmp.ne.s32.totalorder %s97, %s98
      %p110 = scmp.eq.s32.totalorder %s20, 1
      %p111 = por %p109, %p110
      %p113 = scmp.ne.s32.totalorder %s98, %s112
      %p114 = scmp.eq.s32.totalorder %s20, 0
      %p115 = por %p113, %p114
      %s117 = sadd.s32 %s116, 1
      %p120 = scmp.eq.s32.totalorder %s14, 1
      %p121 = scmp.ne.s32.totalorder %s116, %s118
      %p122 = scmp.eq.s32.totalorder %s14, 0
      %p123 = por %p121, %p122
      %p124 = scmp.ne.s32.totalorder %s116, %s118
      %p125 = scmp.eq.s32.totalorder %s19, 1
      %p126 = por %p124, %p125
      %p127 = scmp.ne.s32.totalorder %s118, %s119
      %p128 = scmp.eq.s32.totalorder %s19, 0
      %p129 = por %p127, %p128
      %p130 = scmp.ne.s32.totalorder %s118, %s119
      %p131 = scmp.eq.s32.totalorder %s20, 1
      %p132 = por %p130, %p131
      %p134 = scmp.ne.s32.totalorder %s119, %s133
      %p135 = scmp.eq.s32.totalorder %s20, 0
      %p136 = por %p134, %p135
      %s137 = ssub.s32 %s14, %s21
      %p138 = scmp.eq.s32.totalorder %s137, 0
      %s140 = sadd.s32 %s139, 1
      %s141 = scalar_select %p138, %s139, %s140
      %p144 = pneg %p138
      %p145 = scmp.eq.s32.totalorder %s14, 1
      %p146 = por %p144, %p145
      %p147 = scmp.ne.s32.totalorder %s139, %s142
      %p148 = scmp.eq.s32.totalorder %s14, 0
      %p149 = por %p147, %p148
      %p150 = scmp.ne.s32.totalorder %s139, %s142
      %p151 = scmp.eq.s32.totalorder %s19, 1
      %p152 = por %p150, %p151
      %p153 = scmp.ne.s32.totalorder %s142, %s143
      %p154 = scmp.eq.s32.totalorder %s19, 0
      %p155 = por %p153, %p154
      %p156 = scmp.ne.s32.totalorder %s142, %s143
      %p157 = scmp.eq.s32.totalorder %s20, 1
      %p158 = por %p156, %p157
      %p160 = scmp.ne.s32.totalorder %s143, %s159
      %p161 = scmp.eq.s32.totalorder %s20, 0
      %p162 = por %p160, %p161
      %p163 = scmp.le.s32.totalorder 1, %s14
      %p164 = scmp.lt.s32.totalorder %s14, 3
      %p165 = pnand %p163, %p164
      %p166 = pneg %p165
      // Predicated region
      $region9: #{multi_stage_forward.1} parent=5 // pred_check
        _
      $region10: #{multi_stage_forward.1} parent=5 // pred_check_branch
        %168 = sbr.rel (%p165) target = $region12
      $region11: #{multi_stage_forward.1} parent=5 // pred_region
        %s169 = ssub.s32 %s14, 1
        // Predicated region
        $region13: #{multi_stage_forward.1} parent=11 // pred_check
          %p170 = pneg %p87
        $region14: #{multi_stage_forward.1} parent=11 // pred_check_branch
          %172 = sbr.rel (%p170) target = $region16
        $region15: #{multi_stage_forward.1} parent=11 // pred_region
          _
        $region16: #{multi_stage_forward.1} parent=11 // pred_fallthru
          _
        // Predicated region
        $region17: #{multi_stage_forward.1} parent=11 // pred_check
          %p173 = pneg %p108
        $region18: #{multi_stage_forward.1} parent=11 // pred_check_branch
          %175 = sbr.rel (%p173) target = $region20
        $region19: #{multi_stage_forward.1} parent=11 // pred_region
          _
        $region20: #{multi_stage_forward.1} parent=11 // pred_fallthru
          _
        // Predicated region
        $region21: #{multi_stage_forward.1} parent=11 // pred_check
          %p176 = pneg %p129
        $region22: #{multi_stage_forward.1} parent=11 // pred_check_branch
          %178 = sbr.rel (%p176) target = $region24
        $region23: #{multi_stage_forward.1} parent=11 // pred_region
          _
        $region24: #{multi_stage_forward.1} parent=11 // pred_fallthru
          _
      $region12: #{multi_stage_forward.1} parent=5 // pred_fallthru
        _
      %p179 = scmp.lt.s32.totalorder %s14, 2
      // Predicated region
      $region25: #{multi_stage_forward.1} parent=5 // pred_check
        %p180 = pneg %p179
      $region26: #{multi_stage_forward.1} parent=5 // pred_check_branch
        %182 = sbr.rel (%p180) target = $region28
      $region27: #{multi_stage_forward.1} parent=5 // pred_region
        // Predicated region
        $region29: #{multi_stage_forward.1} parent=27 // pred_check
          %p183 = pneg %p34
        $region30: #{multi_stage_forward.1} parent=27 // pred_check_branch
          %185 = sbr.rel (%p183) target = $region32
        $region31: #{multi_stage_forward.1} parent=27 // pred_region
          %p186 = scmp.lt.s32.totalorder %s14, 1
          %s187 = scalar_select %p186, %s14, 1
          %s188 = smul.addr %s187, 8
          %s189 = scalar_lea.vmem %s0, %s188
        $region32: #{multi_stage_forward.1} parent=27 // pred_fallthru
          _
        // Predicated region
        $region33: #{multi_stage_forward.1} parent=27 // pred_check
          %p190 = pneg %p60
        $region34: #{multi_stage_forward.1} parent=27 // pred_check_branch
          %192 = sbr.rel (%p190) target = $region36
        $region35: #{multi_stage_forward.1} parent=27 // pred_region
          %p193 = scmp.lt.s32.totalorder %s14, 1
          %s194 = scalar_select %p193, %s14, 1
          %s195 = scalar_lea.vmem %s1, %s194
        $region36: #{multi_stage_forward.1} parent=27 // pred_fallthru
          _
      $region28: #{multi_stage_forward.1} parent=5 // pred_fallthru
        _
      %p196 = scmp.le.s32.totalorder 1, %s14
      %p197 = scmp.lt.s32.totalorder %s14, 3
      %p198 = pnand %p196, %p197
      %p199 = pneg %p198
      // Predicated region
      $region37: #{multi_stage_forward.1} parent=5 // pred_check
        _
      $region38: #{multi_stage_forward.1} parent=5 // pred_check_branch
        %201 = sbr.rel (%p198) target = $region40
      $region39: #{multi_stage_forward.1} parent=5 // pred_region
        %s202 = ssub.s32 %s14, 1
        %p203 = scmp.lt.s32.totalorder %s19, 1
        %s204 = scalar_select %p203, %s19, 1
        %s205 = smul.addr %s204, 8
        %s206 = scalar_lea.vmem %s0, %s205
        %p207 = pneg %p40
        %p208 = pneg %p37
        %p209 = scmp.lt.s32.totalorder %s19, 1
        %s210 = scalar_select %p209, %s19, 1
        %s211 = scalar_lea.vmem %s1, %s210
        %p212 = pneg %p66
        %p213 = pneg %p63
        %p214 = pneg %p87
        %p215 = pneg %p84
        %p216 = pneg %p108
        %p217 = pneg %p105
        %p218 = pneg %p129
        %p219 = pneg %p126
        %p220 = pneg %p155
        %p221 = pneg %p152
        %s222 = sand.u32 %s142, 1
        %s223 = scalar_lea.sflag [#allocation3], %s222
        %s224 = sand.u32 %s142, 1
        %s225 = smul.addr %s224, 16
        %s226 = scalar_lea.vmem [#allocation2], %s225
        %p227 = scmp.lt.s32.totalorder %s19, 1
        %s228 = scalar_select %p227, %s19, 1
        %s229 = smul.addr %s228, 8
        %s230 = scalar_lea.vmem %s0, %s229
        %p231 = scmp.lt.s32.totalorder %s19, 1
        %s232 = scalar_select %p231, %s19, 1
        %s233 = scalar_lea.vmem %s1, %s232
        %v235 = vld [vmem:[%s230] sm:$0xff]
        %v236 = vld [vmem:[%s233] sm:$0x1]
        %v237 = vld [vmem:[%s2] sm:$0x3f]
        %v238 = vld [vmem:[%s3] sm:$0xf]
        %v239 = vld [vmem:[%s3 + $0x4] sm:$0xf]
        %v240 = vpack.c.bf16 %v235, %v235
        %v241 = vld [vmem:[%s4] sm:$0xff]
        %v242 = vld [vmem:[%s4 + $0x8] sm:$0xff]
        %244 = vset.pattern.permute.xlu0 0
        %245 = vperm.xlu0 %244, %v241
        %v246 = vpop.permute.xlu0 %245
        %249 = vset.pattern.permute.xlu0 0
        %250 = vperm.xlu0 %249, %v242
        %v251 = vpop.permute.xlu0 %250
        %v255 = vunpack.c.l.b16 %v238
        %v256 = vunpack.c.l.b16 %v239
        %v257 = vpack.c.b16 %v256, %v255
        %vm258 = vcmask 64512
        %v260 = vsel %vm258, %v257, 0
        %vm262 = vcmask 1043456
        %v264 = vsel %vm262, %v240, 0
        %266 = vmatprep.subr.bf16.mxu0 0
        %267 = vmatpush1.bf16.msra.mxu0 %v264
        %268 = vmatprep.subr.bf16.mxu0 0
        %269 = vmatpush1.bf16.msra.mxu0 0
        %270 = vmatprep.subr.bf16.mxu0 0
        %271 = vmatpush1.bf16.msra.mxu0 0
        %272 = vmatprep.subr.bf16.mxu0 0
        %273 = vmatpush1.bf16.msra.mxu0 0
        %274 = vmatprep.subr.bf16.mxu0 0
        %275 = vmatpush1.bf16.msra.mxu0 0
        %276 = vmatprep.subr.bf16.mxu0 0
        %277 = vmatpush1.bf16.msra.mxu0 0
        %278 = vmatprep.subr.bf16.mxu0 0
        %279 = vmatpush1.bf16.msra.mxu0 0
        %280 = vmatprep.subr.bf16.mxu0 0
        %281 = vmatpush1.bf16.msra.mxu0 0
        %282 = vmatprep.subr.bf16.mxu0 0
        %283 = vmatpush1.bf16.msra.mxu0 0
        %284 = vmatprep.subr.bf16.mxu0 0
        %285 = vmatpush1.bf16.msra.mxu0 0
        %286 = vmatprep.subr.bf16.mxu0 0
        %287 = vmatpush1.bf16.msra.mxu0 0
        %288 = vmatprep.subr.bf16.mxu0 0
        %289 = vmatpush1.bf16.msra.mxu0 0
        %290 = vmatprep.subr.bf16.mxu0 0
        %291 = vmatpush1.bf16.msra.mxu0 0
        %292 = vmatprep.subr.bf16.mxu0 0
        %293 = vmatpush1.bf16.msra.mxu0 0
        %294 = vmatprep.subr.bf16.mxu0 0
        %295 = vmatpush1.bf16.msra.mxu0 0
        %296 = vmatprep.subr.bf16.mxu0 0
        %297 = vmatpush1.bf16.msra.mxu0 0
        %298 = vmatprep.mubr.bf16.mxu0 0
        %299 = vmatmul.mubr.bf16.gmra.mrb[0].mxu0 %v260
        %v300 = vpop.f32.mrb[0].mxu0
        %v301 = vadd.f32 %v246, %v300
        %v302 = vpop.f32.mrb[0].mxu0
        %v303 = vpop.f32.mrb[0].mxu0
        %v304 = vadd.f32 %v251, %v303
        %v305 = vpop.f32.mrb[0].mxu0
        %306 = vdwg.mxu0
        %v307 = vld [vmem:[%s3 + $0x8] sm:$0xf]
        %v308 = vld [vmem:[%s3 + $0xc] sm:$0xf]
        %v309 = vld [vmem:[%s3 + $0x10] sm:$0xf]
        %v310 = vld [vmem:[%s3 + $0x14] sm:$0xf]
        %311 = vrot.lane.b32.xlu0 %v301, 1
        %v312 = vpop.permute.xlu0 %311
        %313 = vrot.lane.b32.xlu0 %v304, 1
        %v314 = vpop.permute.xlu0 %313
        %v315 = vlaneseq
        %v316 = vshrl.u32 %v315, 7
        %v317 = vsub.s32 0, %v316
        %v318 = vrot.slane %v237, %v317
        %v319 = vmul.f32 %v312, %v318
        %v320 = vmul.f32 %v314, %v318
        %321 = vrot.lane.b32.xlu0 %v301, 127
        %v322 = vpop.permute.xlu0 %321
        %323 = vrot.lane.b32.xlu0 %v304, 127
        %v324 = vpop.permute.xlu0 %323
        %v325 = vlaneseq
        %v326 = vshrl.u32 %v325, 7
        %v327 = vsub.s32 1, %v326
        %v328 = vrot.slane %v237, %v327
        %v329 = vmul.f32 %v322, %v328
        %v330 = vmul.f32 %v324, %v328
        %v331 = vpack.c.bf16 %v320, %v319
        %v332 = vpack.c.bf16 %v304, %v301
        %v333 = vpack.c.bf16 %v330, %v329
        %334 = vset.pattern.permute.xlu0 1
        %335 = vperm.xlu0 %334, %v241
        %v336 = vpop.permute.xlu0 %335
        %338 = vset.pattern.permute.xlu0 1
        %339 = vperm.xlu0 %338, %v242
        %v340 = vpop.permute.xlu0 %339
        %v344 = vunpack.c.l.b16 %v307
        %v345 = vunpack.c.l.b16 %v308
        %v346 = vpack.c.b16 %v345, %v344
        %vm347 = vcmask 392192
        %v349 = vsel %vm347, %v346, 0
        %351 = vmatprep.subr.bf16.mxu0 0
        %352 = vmatpush1.bf16.msra.mxu0 %v331
        %353 = vmatprep.subr.bf16.mxu0 0
        %354 = vmatpush1.bf16.msra.mxu0 %v332
        %355 = vmatprep.subr.bf16.mxu0 0
        %356 = vmatpush1.bf16.msra.mxu0 %v333
        %357 = vmatprep.subr.bf16.mxu0 0
        %358 = vmatpush1.bf16.msra.mxu0 0
        %359 = vmatprep.subr.bf16.mxu0 0
        %360 = vmatpush1.bf16.msra.mxu0 0
        %361 = vmatprep.subr.bf16.mxu0 0
        %362 = vmatpush1.bf16.msra.mxu0 0
        %363 = vmatprep.subr.bf16.mxu0 0
        %364 = vmatpush1.bf16.msra.mxu0 0
        %365 = vmatprep.subr.bf16.mxu0 0
        %366 = vmatpush1.bf16.msra.mxu0 0
        %367 = vmatprep.subr.bf16.mxu0 0
        %368 = vmatpush1.bf16.msra.mxu0 0
        %369 = vmatprep.subr.bf16.mxu0 0
        %370 = vmatpush1.bf16.msra.mxu0 0
        %371 = vmatprep.subr.bf16.mxu0 0
        %372 = vmatpush1.bf16.msra.mxu0 0
        %373 = vmatprep.subr.bf16.mxu0 0
        %374 = vmatpush1.bf16.msra.mxu0 0
        %375 = vmatprep.subr.bf16.mxu0 0
        %376 = vmatpush1.bf16.msra.mxu0 0
        %377 = vmatprep.subr.bf16.mxu0 0
        %378 = vmatpush1.bf16.msra.mxu0 0
        %379 = vmatprep.subr.bf16.mxu0 0
        %380 = vmatpush1.bf16.msra.mxu0 0
        %381 = vmatprep.subr.bf16.mxu0 0
        %382 = vmatpush1.bf16.msra.mxu0 0
        %383 = vmatprep.mubr.bf16.mxu0 0
        %384 = vmatmul.mubr.bf16.gmra.mrb[0].mxu0 %v349
        %v385 = vpop.f32.mrb[0].mxu0
        %v386 = vadd.f32 %v336, %v385
        %v387 = vpop.f32.mrb[0].mxu0
        %v388 = vpop.f32.mrb[0].mxu0
        %v389 = vadd.f32 %v340, %v388
        %v390 = vpop.f32.mrb[0].mxu0
        %391 = vdwg.mxu0
        %v392 = vmax.f32 %v386, 0.0
        %v393 = vmax.f32 %v389, 0.0
        %v394 = vpack.c.bf16 %v393, %v392
        %395 = vset.pattern.permute.xlu0 2
        %396 = vperm.xlu0 %395, %v241
        %v397 = vpop.permute.xlu0 %396
        %399 = vset.pattern.permute.xlu0 2
        %400 = vperm.xlu0 %399, %v242
        %v401 = vpop.permute.xlu0 %400
        %v405 = vunpack.c.l.b16 %v309
        %v406 = vunpack.c.l.b16 %v310
        %v407 = vpack.c.b16 %v406, %v405
        %vm408 = vcmask 130048
        %v410 = vsel %vm408, %v407, 0
        %412 = vmatprep.subr.bf16.mxu0 0
        %413 = vmatpush1.bf16.msra.mxu0 %v394
        %414 = vmatprep.subr.bf16.mxu0 0
        %415 = vmatpush1.bf16.msra.mxu0 0
        %416 = vmatprep.subr.bf16.mxu0 0
        %417 = vmatpush1.bf16.msra.mxu0 0
        %418 = vmatprep.subr.bf16.mxu0 0
        %419 = vmatpush1.bf16.msra.mxu0 0
        %420 = vmatprep.subr.bf16.mxu0 0
        %421 = vmatpush1.bf16.msra.mxu0 0
        %422 = vmatprep.subr.bf16.mxu0 0
        %423 = vmatpush1.bf16.msra.mxu0 0
        %424 = vmatprep.subr.bf16.mxu0 0
        %425 = vmatpush1.bf16.msra.mxu0 0
        %426 = vmatprep.subr.bf16.mxu0 0
        %427 = vmatpush1.bf16.msra.mxu0 0
        %428 = vmatprep.subr.bf16.mxu0 0
        %429 = vmatpush1.bf16.msra.mxu0 0
        %430 = vmatprep.subr.bf16.mxu0 0
        %431 = vmatpush1.bf16.msra.mxu0 0
        %432 = vmatprep.subr.bf16.mxu0 0
        %433 = vmatpush1.bf16.msra.mxu0 0
        %434 = vmatprep.subr.bf16.mxu0 0
        %435 = vmatpush1.bf16.msra.mxu0 0
        %436 = vmatprep.subr.bf16.mxu0 0
        %437 = vmatpush1.bf16.msra.mxu0 0
        %438 = vmatprep.subr.bf16.mxu0 0
        %439 = vmatpush1.bf16.msra.mxu0 0
        %440 = vmatprep.subr.bf16.mxu0 0
        %441 = vmatpush1.bf16.msra.mxu0 0
        %442 = vmatprep.subr.bf16.mxu0 0
        %443 = vmatpush1.bf16.msra.mxu0 0
        %444 = vmatprep.mubr.bf16.mxu0 0
        %445 = vmatmul.mubr.bf16.gmra.mrb[0].mxu0 %v410
        %v446 = vpop.f32.mrb[0].mxu0
        %v447 = vadd.f32 %v397, %v446
        %v448 = vpop.f32.mrb[0].mxu0
        %v449 = vpop.f32.mrb[0].mxu0
        %v450 = vadd.f32 %v401, %v449
        %v451 = vpop.f32.mrb[0].mxu0
        %452 = vdwg.mxu0
        %v453 = vadd.f32 %v301, %v447
        %v454 = vadd.f32 %v304, %v450
        %v456 = vlaneseq
        %v457 = vshrl.u32 %v456, 7
        %v458 = vsub.s32 0, %v457
        %v459 = vrot.slane %v236, %v458
        %v461 = vmul.f32 %v453, %v459
        %v462 = vmul.f32 %v454, %v459
        %v463 = vld [vmem:[%s3 + $0x18] sm:$0xf]
        %v464 = vld [vmem:[%s3 + $0x1c] sm:$0xf]
        %v465 = vld [vmem:[%s3 + $0x20] sm:$0xf]
        %v466 = vld [vmem:[%s3 + $0x24] sm:$0xf]
        %467 = vrot.lane.b32.xlu0 %v461, 2
        %v468 = vpop.permute.xlu0 %467
        %469 = vrot.lane.b32.xlu0 %v462, 2
        %v470 = vpop.permute.xlu0 %469
        %v471 = vlaneseq
        %v472 = vshrl.u32 %v471, 7
        %v473 = vsub.s32 2, %v472
        %v474 = vrot.slane %v237, %v473
        %v475 = vmul.f32 %v468, %v474
        %v476 = vmul.f32 %v470, %v474
        %477 = vrot.lane.b32.xlu0 %v461, 126
        %v478 = vpop.permute.xlu0 %477
        %479 = vrot.lane.b32.xlu0 %v462, 126
        %v480 = vpop.permute.xlu0 %479
        %v481 = vlaneseq
        %v482 = vshrl.u32 %v481, 7
        %v483 = vsub.s32 3, %v482
        %v484 = vrot.slane %v237, %v483
        %v485 = vmul.f32 %v478, %v484
        %v486 = vmul.f32 %v480, %v484
        %v487 = vpack.c.bf16 %v476, %v475
        %v488 = vpack.c.bf16 %v462, %v461
        %v489 = vpack.c.bf16 %v486, %v485
        %490 = vset.pattern.permute.xlu0 3
        %491 = vperm.xlu0 %490, %v241
        %v492 = vpop.permute.xlu0 %491
        %494 = vset.pattern.permute.xlu0 3
        %495 = vperm.xlu0 %494, %v242
        %v496 = vpop.permute.xlu0 %495
        %v500 = vunpack.c.l.b16 %v463
        %v501 = vunpack.c.l.b16 %v464
        %v502 = vpack.c.b16 %v501, %v500
        %v504 = vsel %vm347, %v502, 0
        %506 = vmatprep.subr.bf16.mxu0 0
        %507 = vmatpush1.bf16.msra.mxu0 %v487
        %508 = vmatprep.subr.bf16.mxu0 0
        %509 = vmatpush1.bf16.msra.mxu0 %v488
        %510 = vmatprep.subr.bf16.mxu0 0
        %511 = vmatpush1.bf16.msra.mxu0 %v489
        %512 = vmatprep.subr.bf16.mxu0 0
        %513 = vmatpush1.bf16.msra.mxu0 0
        %514 = vmatprep.subr.bf16.mxu0 0
        %515 = vmatpush1.bf16.msra.mxu0 0
        %516 = vmatprep.subr.bf16.mxu0 0
        %517 = vmatpush1.bf16.msra.mxu0 0
        %518 = vmatprep.subr.bf16.mxu0 0
        %519 = vmatpush1.bf16.msra.mxu0 0
        %520 = vmatprep.subr.bf16.mxu0 0
        %521 = vmatpush1.bf16.msra.mxu0 0
        %522 = vmatprep.subr.bf16.mxu0 0
        %523 = vmatpush1.bf16.msra.mxu0 0
        %524 = vmatprep.subr.bf16.mxu0 0
        %525 = vmatpush1.bf16.msra.mxu0 0
        %526 = vmatprep.subr.bf16.mxu0 0
        %527 = vmatpush1.bf16.msra.mxu0 0
        %528 = vmatprep.subr.bf16.mxu0 0
        %529 = vmatpush1.bf16.msra.mxu0 0
        %530 = vmatprep.subr.bf16.mxu0 0
        %531 = vmatpush1.bf16.msra.mxu0 0
        %532 = vmatprep.subr.bf16.mxu0 0
        %533 = vmatpush1.bf16.msra.mxu0 0
        %534 = vmatprep.subr.bf16.mxu0 0
        %535 = vmatpush1.bf16.msra.mxu0 0
        %536 = vmatprep.subr.bf16.mxu0 0
        %537 = vmatpush1.bf16.msra.mxu0 0
        %538 = vmatprep.mubr.bf16.mxu0 0
        %539 = vmatmul.mubr.bf16.gmra.mrb[0].mxu0 %v504
        %v540 = vpop.f32.mrb[0].mxu0
        %v541 = vadd.f32 %v492, %v540
        %v542 = vpop.f32.mrb[0].mxu0
        %v543 = vpop.f32.mrb[0].mxu0
        %v544 = vadd.f32 %v496, %v543
        %v545 = vpop.f32.mrb[0].mxu0
        %546 = vdwg.mxu0
        %v547 = vmax.f32 %v541, 0.0
        %v548 = vmax.f32 %v544, 0.0
        %v549 = vpack.c.bf16 %v548, %v547
        %550 = vset.pattern.permute.xlu0 4
        %551 = vperm.xlu0 %550, %v241
        %v552 = vpop.permute.xlu0 %551
        %554 = vset.pattern.permute.xlu0 4
        %555 = vperm.xlu0 %554, %v242
        %v556 = vpop.permute.xlu0 %555
        %v560 = vunpack.c.l.b16 %v465
        %v561 = vunpack.c.l.b16 %v466
        %v562 = vpack.c.b16 %v561, %v560
        %v564 = vsel %vm408, %v562, 0
        %566 = vmatprep.subr.bf16.mxu0 0
        %567 = vmatpush1.bf16.msra.mxu0 %v549
        %568 = vmatprep.subr.bf16.mxu0 0
        %569 = vmatpush1.bf16.msra.mxu0 0
        %570 = vmatprep.subr.bf16.mxu0 0
        %571 = vmatpush1.bf16.msra.mxu0 0
        %572 = vmatprep.subr.bf16.mxu0 0
        %573 = vmatpush1.bf16.msra.mxu0 0
        %574 = vmatprep.subr.bf16.mxu0 0
        %575 = vmatpush1.bf16.msra.mxu0 0
        %576 = vmatprep.subr.bf16.mxu0 0
        %577 = vmatpush1.bf16.msra.mxu0 0
        %578 = vmatprep.subr.bf16.mxu0 0
        %579 = vmatpush1.bf16.msra.mxu0 0
        %580 = vmatprep.subr.bf16.mxu0 0
        %581 = vmatpush1.bf16.msra.mxu0 0
        %582 = vmatprep.subr.bf16.mxu0 0
        %583 = vmatpush1.bf16.msra.mxu0 0
        %584 = vmatprep.subr.bf16.mxu0 0
        %585 = vmatpush1.bf16.msra.mxu0 0
        %586 = vmatprep.subr.bf16.mxu0 0
        %587 = vmatpush1.bf16.msra.mxu0 0
        %588 = vmatprep.subr.bf16.mxu0 0
        %589 = vmatpush1.bf16.msra.mxu0 0
        %590 = vmatprep.subr.bf16.mxu0 0
        %591 = vmatpush1.bf16.msra.mxu0 0
        %592 = vmatprep.subr.bf16.mxu0 0
        %593 = vmatpush1.bf16.msra.mxu0 0
        %594 = vmatprep.subr.bf16.mxu0 0
        %595 = vmatpush1.bf16.msra.mxu0 0
        %596 = vmatprep.subr.bf16.mxu0 0
        %597 = vmatpush1.bf16.msra.mxu0 0
        %598 = vmatprep.mubr.bf16.mxu0 0
        %599 = vmatmul.mubr.bf16.gmra.mrb[0].mxu0 %v564
        %v600 = vpop.f32.mrb[0].mxu0
        %v601 = vadd.f32 %v552, %v600
        %v602 = vpop.f32.mrb[0].mxu0
        %v603 = vpop.f32.mrb[0].mxu0
        %v604 = vadd.f32 %v556, %v603
        %v605 = vpop.f32.mrb[0].mxu0
        %606 = vdwg.mxu0
        %v607 = vadd.f32 %v461, %v601
        %v608 = vadd.f32 %v462, %v604
        %v609 = vmul.f32 %v607, %v459
        %v610 = vmul.f32 %v608, %v459
        %v611 = vld [vmem:[%s3 + $0x28] sm:$0xf]
        %v612 = vld [vmem:[%s3 + $0x2c] sm:$0xf]
        %v613 = vld [vmem:[%s3 + $0x30] sm:$0xf]
        %v614 = vld [vmem:[%s3 + $0x34] sm:$0xf]
        %615 = vrot.lane.b32.xlu0 %v609, 4
        %v616 = vpop.permute.xlu0 %615
        %617 = vrot.lane.b32.xlu0 %v610, 4
        %v618 = vpop.permute.xlu0 %617
        %v619 = vlaneseq
        %v620 = vshrl.u32 %v619, 7
        %v621 = vsub.s32 4, %v620
        %v622 = vrot.slane %v237, %v621
        %v623 = vmul.f32 %v616, %v622
        %v624 = vmul.f32 %v618, %v622
        %625 = vrot.lane.b32.xlu0 %v609, 124
        %v626 = vpop.permute.xlu0 %625
        %627 = vrot.lane.b32.xlu0 %v610, 124
        %v628 = vpop.permute.xlu0 %627
        %v629 = vlaneseq
        %v630 = vshrl.u32 %v629, 7
        %v631 = vsub.s32 5, %v630
        %v632 = vrot.slane %v237, %v631
        %v633 = vmul.f32 %v626, %v632
        %v634 = vmul.f32 %v628, %v632
        %v635 = vpack.c.bf16 %v624, %v623
        %v636 = vpack.c.bf16 %v610, %v609
        %v637 = vpack.c.bf16 %v634, %v633
        %638 = vset.pattern.permute.xlu0 5
        %639 = vperm.xlu0 %638, %v241
        %v640 = vpop.permute.xlu0 %639
        %642 = vset.pattern.permute.xlu0 5
        %643 = vperm.xlu0 %642, %v242
        %v644 = vpop.permute.xlu0 %643
        %v648 = vunpack.c.l.b16 %v611
        %v649 = vunpack.c.l.b16 %v612
        %v650 = vpack.c.b16 %v649, %v648
        %v652 = vsel %vm347, %v650, 0
        %654 = vmatprep.subr.bf16.mxu0 0
        %655 = vmatpush1.bf16.msra.mxu0 %v635
        %656 = vmatprep.subr.bf16.mxu0 0
        %657 = vmatpush1.bf16.msra.mxu0 %v636
        %658 = vmatprep.subr.bf16.mxu0 0
        %659 = vmatpush1.bf16.msra.mxu0 %v637
        %660 = vmatprep.subr.bf16.mxu0 0
        %661 = vmatpush1.bf16.msra.mxu0 0
        %662 = vmatprep.subr.bf16.mxu0 0
        %663 = vmatpush1.bf16.msra.mxu0 0
        %664 = vmatprep.subr.bf16.mxu0 0
        %665 = vmatpush1.bf16.msra.mxu0 0
        %666 = vmatprep.subr.bf16.mxu0 0
        %667 = vmatpush1.bf16.msra.mxu0 0
        %668 = vmatprep.subr.bf16.mxu0 0
        %669 = vmatpush1.bf16.msra.mxu0 0
        %670 = vmatprep.subr.bf16.mxu0 0
        %671 = vmatpush1.bf16.msra.mxu0 0
        %672 = vmatprep.subr.bf16.mxu0 0
        %673 = vmatpush1.bf16.msra.mxu0 0
        %674 = vmatprep.subr.bf16.mxu0 0
        %675 = vmatpush1.bf16.msra.mxu0 0
        %676 = vmatprep.subr.bf16.mxu0 0
        %677 = vmatpush1.bf16.msra.mxu0 0
        %678 = vmatprep.subr.bf16.mxu0 0
        %679 = vmatpush1.bf16.msra.mxu0 0
        %680 = vmatprep.subr.bf16.mxu0 0
        %681 = vmatpush1.bf16.msra.mxu0 0
        %682 = vmatprep.subr.bf16.mxu0 0
        %683 = vmatpush1.bf16.msra.mxu0 0
        %684 = vmatprep.subr.bf16.mxu0 0
        %685 = vmatpush1.bf16.msra.mxu0 0
        %686 = vmatprep.mubr.bf16.mxu0 0
        %687 = vmatmul.mubr.bf16.gmra.mrb[0].mxu0 %v652
        %v688 = vpop.f32.mrb[0].mxu0
        %v689 = vadd.f32 %v640, %v688
        %v690 = vpop.f32.mrb[0].mxu0
        %v691 = vpop.f32.mrb[0].mxu0
        %v692 = vadd.f32 %v644, %v691
        %v693 = vpop.f32.mrb[0].mxu0
        %694 = vdwg.mxu0
        %v695 = vmax.f32 %v689, 0.0
        %v696 = vmax.f32 %v692, 0.0
        %v697 = vpack.c.bf16 %v696, %v695
        %698 = vset.pattern.permute.xlu0 6
        %699 = vperm.xlu0 %698, %v241
        %v700 = vpop.permute.xlu0 %699
        %702 = vset.pattern.permute.xlu0 6
        %703 = vperm.xlu0 %702, %v242
        %v704 = vpop.permute.xlu0 %703
        %v708 = vunpack.c.l.b16 %v613
        %v709 = vunpack.c.l.b16 %v614
        %v710 = vpack.c.b16 %v709, %v708
        %v712 = vsel %vm408, %v710, 0
        %714 = vmatprep.subr.bf16.mxu0 0
        %715 = vmatpush1.bf16.msra.mxu0 %v697
        %716 = vmatprep.subr.bf16.mxu0 0
        %717 = vmatpush1.bf16.msra.mxu0 0
        %718 = vmatprep.subr.bf16.mxu0 0
        %719 = vmatpush1.bf16.msra.mxu0 0
        %720 = vmatprep.subr.bf16.mxu0 0
        %721 = vmatpush1.bf16.msra.mxu0 0
        %722 = vmatprep.subr.bf16.mxu0 0
        %723 = vmatpush1.bf16.msra.mxu0 0
        %724 = vmatprep.subr.bf16.mxu0 0
        %725 = vmatpush1.bf16.msra.mxu0 0
        %726 = vmatprep.subr.bf16.mxu0 0
        %727 = vmatpush1.bf16.msra.mxu0 0
        %728 = vmatprep.subr.bf16.mxu0 0
        %729 = vmatpush1.bf16.msra.mxu0 0
        %730 = vmatprep.subr.bf16.mxu0 0
        %731 = vmatpush1.bf16.msra.mxu0 0
        %732 = vmatprep.subr.bf16.mxu0 0
        %733 = vmatpush1.bf16.msra.mxu0 0
        %734 = vmatprep.subr.bf16.mxu0 0
        %735 = vmatpush1.bf16.msra.mxu0 0
        %736 = vmatprep.subr.bf16.mxu0 0
        %737 = vmatpush1.bf16.msra.mxu0 0
        %738 = vmatprep.subr.bf16.mxu0 0
        %739 = vmatpush1.bf16.msra.mxu0 0
        %740 = vmatprep.subr.bf16.mxu0 0
        %741 = vmatpush1.bf16.msra.mxu0 0
        %742 = vmatprep.subr.bf16.mxu0 0
        %743 = vmatpush1.bf16.msra.mxu0 0
        %744 = vmatprep.subr.bf16.mxu0 0
        %745 = vmatpush1.bf16.msra.mxu0 0
        %746 = vmatprep.mubr.bf16.mxu0 0
        %747 = vmatmul.mubr.bf16.gmra.mrb[0].mxu0 %v712
        %v748 = vpop.f32.mrb[0].mxu0
        %v749 = vadd.f32 %v700, %v748
        %v750 = vpop.f32.mrb[0].mxu0
        %v751 = vpop.f32.mrb[0].mxu0
        %v752 = vadd.f32 %v704, %v751
        %v753 = vpop.f32.mrb[0].mxu0
        %754 = vdwg.mxu0
        %v755 = vadd.f32 %v609, %v749
        %v756 = vadd.f32 %v610, %v752
        %v757 = vmul.f32 %v755, %v459
        %v758 = vmul.f32 %v756, %v459
        %v759 = vld [vmem:[%s3 + $0x38] sm:$0xf]
        %v760 = vpack.c.bf16 %v758, %v757
        %v761 = vld [vmem:[%s4] sm:$0xff]
        %763 = vset.pattern.permute.xlu0 7
        %764 = vperm.xlu0 %763, %v761
        %v765 = vpop.permute.xlu0 %764
        %v768 = vsel %vm408, %v759, 0
        %770 = vmatprep.subr.bf16.mxu0 0
        %771 = vmatpush1.bf16.msra.mxu0 %v760
        %772 = vmatprep.subr.bf16.mxu0 0
        %773 = vmatpush1.bf16.msra.mxu0 0
        %774 = vmatprep.subr.bf16.mxu0 0
        %775 = vmatpush1.bf16.msra.mxu0 0
        %776 = vmatprep.subr.bf16.mxu0 0
        %777 = vmatpush1.bf16.msra.mxu0 0
        %778 = vmatprep.subr.bf16.mxu0 0
        %779 = vmatpush1.bf16.msra.mxu0 0
        %780 = vmatprep.subr.bf16.mxu0 0
        %781 = vmatpush1.bf16.msra.mxu0 0
        %782 = vmatprep.subr.bf16.mxu0 0
        %783 = vmatpush1.bf16.msra.mxu0 0
        %784 = vmatprep.subr.bf16.mxu0 0
        %785 = vmatpush1.bf16.msra.mxu0 0
        %786 = vmatprep.subr.bf16.mxu0 0
        %787 = vmatpush1.bf16.msra.mxu0 0
        %788 = vmatprep.subr.bf16.mxu0 0
        %789 = vmatpush1.bf16.msra.mxu0 0
        %790 = vmatprep.subr.bf16.mxu0 0
        %791 = vmatpush1.bf16.msra.mxu0 0
        %792 = vmatprep.subr.bf16.mxu0 0
        %793 = vmatpush1.bf16.msra.mxu0 0
        %794 = vmatprep.subr.bf16.mxu0 0
        %795 = vmatpush1.bf16.msra.mxu0 0
        %796 = vmatprep.subr.bf16.mxu0 0
        %797 = vmatpush1.bf16.msra.mxu0 0
        %798 = vmatprep.subr.bf16.mxu0 0
        %799 = vmatpush1.bf16.msra.mxu0 0
        %800 = vmatprep.subr.bf16.mxu0 0
        %801 = vmatpush1.bf16.msra.mxu0 0
        %802 = vmatprep.mubr.bf16.mxu0 0
        %803 = vmatmul.mubr.bf16.gmra.mrb[0].mxu0 %v768
        %v804 = vpop.f32.mrb[0].mxu0
        %v805 = vadd.f32 %v765, %v804
        %v806 = vpop.f32.mrb[0].mxu0
        %v807 = vpop.f32.mrb[0].mxu0
        %v808 = vpop.f32.mrb[0].mxu0
        %809 = vdwg.mxu0
        %v810 = vmul.f32 %v805, %v459
        %811 = vst [vmem:[%s226] sm:$0xff] %v810
        %v812 = vrot.slane %v810, 4
        %v813 = vmax.f32 %v810, %v812
        %v814 = vrot.slane %v813, 2
        %v815 = vmax.f32 %v813, %v814
        %v816 = vrot.slane %v815, 1
        %v817 = vmax.f32 %v815, %v816
        %v818 = vsub.f32 %v810, %v817
        %v819 = vmul.f32 %v818, 1.442695
        %v820 = vpow.pop %v819
        %v821 = vrot.slane %v820, 4
        %v822 = vadd.f32 %v820, %v821
        %v823 = vrot.slane %v822, 2
        %v824 = vadd.f32 %v822, %v823
        %v825 = vrot.slane %v824, 1
        %v826 = vadd.f32 %v824, %v825
        %v827 = vrcp.pop %v826
        %v828 = vmul.f32 %v820, %v827
        %v829 = vmul.f32 %v828, %v459
        %v830 = vld [vmem:[%s3 + $0x3c] sm:$0xf]
        %v831 = vld [vmem:[%s3 + $0x40] sm:$0xf]
        %v832 = vpack.c.bf16 %v829, %v829
        %v833 = vld [vmem:[%s4] sm:$0xff]
        %v834 = vld [vmem:[%s4 + $0x8] sm:$0xff]
        %836 = vset.pattern.permute.xlu0 8
        %837 = vperm.xlu0 %836, %v833
        %v838 = vpop.permute.xlu0 %837
        %841 = vset.pattern.permute.xlu0 8
        %842 = vperm.xlu0 %841, %v834
        %v843 = vpop.permute.xlu0 %842
        %v847 = vunpack.c.l.b16 %v830
        %v848 = vunpack.c.l.b16 %v831
        %v849 = vpack.c.b16 %v848, %v847
        %v851 = vsel %vm258, %v849, 0
        %v854 = vsel %vm262, %v832, 0
        %856 = vmatprep.subr.bf16.mxu0 0
        %857 = vmatpush1.bf16.msra.mxu0 %v854
        %858 = vmatprep.subr.bf16.mxu0 0
        %859 = vmatpush1.bf16.msra.mxu0 0
        %860 = vmatprep.subr.bf16.mxu0 0
        %861 = vmatpush1.bf16.msra.mxu0 0
        %862 = vmatprep.subr.bf16.mxu0 0
        %863 = vmatpush1.bf16.msra.mxu0 0
        %864 = vmatprep.subr.bf16.mxu0 0
        %865 = vmatpush1.bf16.msra.mxu0 0
        %866 = vmatprep.subr.bf16.mxu0 0
        %867 = vmatpush1.bf16.msra.mxu0 0
        %868 = vmatprep.subr.bf16.mxu0 0
        %869 = vmatpush1.bf16.msra.mxu0 0
        %870 = vmatprep.subr.bf16.mxu0 0
        %871 = vmatpush1.bf16.msra.mxu0 0
        %872 = vmatprep.subr.bf16.mxu0 0
        %873 = vmatpush1.bf16.msra.mxu0 0
        %874 = vmatprep.subr.bf16.mxu0 0
        %875 = vmatpush1.bf16.msra.mxu0 0
        %876 = vmatprep.subr.bf16.mxu0 0
        %877 = vmatpush1.bf16.msra.mxu0 0
        %878 = vmatprep.subr.bf16.mxu0 0
        %879 = vmatpush1.bf16.msra.mxu0 0
        %880 = vmatprep.subr.bf16.mxu0 0
        %881 = vmatpush1.bf16.msra.mxu0 0
        %882 = vmatprep.subr.bf16.mxu0 0
        %883 = vmatpush1.bf16.msra.mxu0 0
        %884 = vmatprep.subr.bf16.mxu0 0
        %885 = vmatpush1.bf16.msra.mxu0 0
        %886 = vmatprep.subr.bf16.mxu0 0
        %887 = vmatpush1.bf16.msra.mxu0 0
        %888 = vmatprep.mubr.bf16.mxu0 0
        %889 = vmatmul.mubr.bf16.gmra.mrb[0].mxu0 %v851
        %v890 = vpop.f32.mrb[0].mxu0
        %v891 = vadd.f32 %v838, %v890
        %v892 = vpop.f32.mrb[0].mxu0
        %v893 = vpop.f32.mrb[0].mxu0
        %v894 = vadd.f32 %v843, %v893
        %v895 = vpop.f32.mrb[0].mxu0
        %896 = vdwg.mxu0
        %v897 = vld [vmem:[%s3 + $0x44] sm:$0xf]
        %v898 = vld [vmem:[%s3 + $0x48] sm:$0xf]
        %v899 = vld [vmem:[%s3 + $0x4c] sm:$0xf]
        %v900 = vld [vmem:[%s3 + $0x50] sm:$0xf]
        %901 = vrot.lane.b32.xlu0 %v891, 1
        %v902 = vpop.permute.xlu0 %901
        %903 = vrot.lane.b32.xlu0 %v894, 1
        %v904 = vpop.permute.xlu0 %903
        %v905 = vmul.f32 %v902, %v318
        %v906 = vmul.f32 %v904, %v318
        %907 = vrot.lane.b32.xlu0 %v891, 127
        %v908 = vpop.permute.xlu0 %907
        %909 = vrot.lane.b32.xlu0 %v894, 127
        %v910 = vpop.permute.xlu0 %909
        %v911 = vmul.f32 %v908, %v328
        %v912 = vmul.f32 %v910, %v328
        %v913 = vpack.c.bf16 %v906, %v905
        %v914 = vpack.c.bf16 %v894, %v891
        %v915 = vpack.c.bf16 %v912, %v911
        %916 = vset.pattern.permute.xlu0 9
        %917 = vperm.xlu0 %916, %v833
        %v918 = vpop.permute.xlu0 %917
        %920 = vset.pattern.permute.xlu0 9
        %921 = vperm.xlu0 %920, %v834
        %v922 = vpop.permute.xlu0 %921
        %v926 = vunpack.c.l.b16 %v897
        %v927 = vunpack.c.l.b16 %v898
        %v928 = vpack.c.b16 %v927, %v926
        %v930 = vsel %vm347, %v928, 0
        %932 = vmatprep.subr.bf16.mxu0 0
        %933 = vmatpush1.bf16.msra.mxu0 %v913
        %934 = vmatprep.subr.bf16.mxu0 0
        %935 = vmatpush1.bf16.msra.mxu0 %v914
        %936 = vmatprep.subr.bf16.mxu0 0
        %937 = vmatpush1.bf16.msra.mxu0 %v915
        %938 = vmatprep.subr.bf16.mxu0 0
        %939 = vmatpush1.bf16.msra.mxu0 0
        %940 = vmatprep.subr.bf16.mxu0 0
        %941 = vmatpush1.bf16.msra.mxu0 0
        %942 = vmatprep.subr.bf16.mxu0 0
        %943 = vmatpush1.bf16.msra.mxu0 0
        %944 = vmatprep.subr.bf16.mxu0 0
        %945 = vmatpush1.bf16.msra.mxu0 0
        %946 = vmatprep.subr.bf16.mxu0 0
        %947 = vmatpush1.bf16.msra.mxu0 0
        %948 = vmatprep.subr.bf16.mxu0 0
        %949 = vmatpush1.bf16.msra.mxu0 0
        %950 = vmatprep.subr.bf16.mxu0 0
        %951 = vmatpush1.bf16.msra.mxu0 0
        %952 = vmatprep.subr.bf16.mxu0 0
        %953 = vmatpush1.bf16.msra.mxu0 0
        %954 = vmatprep.subr.bf16.mxu0 0
        %955 = vmatpush1.bf16.msra.mxu0 0
        %956 = vmatprep.subr.bf16.mxu0 0
        %957 = vmatpush1.bf16.msra.mxu0 0
        %958 = vmatprep.subr.bf16.mxu0 0
        %959 = vmatpush1.bf16.msra.mxu0 0
        %960 = vmatprep.subr.bf16.mxu0 0
        %961 = vmatpush1.bf16.msra.mxu0 0
        %962 = vmatprep.subr.bf16.mxu0 0
        %963 = vmatpush1.bf16.msra.mxu0 0
        %964 = vmatprep.mubr.bf16.mxu0 0
        %965 = vmatmul.mubr.bf16.gmra.mrb[0].mxu0 %v930
        %v966 = vpop.f32.mrb[0].mxu0
        %v967 = vadd.f32 %v918, %v966
        %v968 = vpop.f32.mrb[0].mxu0
        %v969 = vpop.f32.mrb[0].mxu0
        %v970 = vadd.f32 %v922, %v969
        %v971 = vpop.f32.mrb[0].mxu0
        %972 = vdwg.mxu0
        %v973 = vmax.f32 %v967, 0.0
        %v974 = vmax.f32 %v970, 0.0
        %v975 = vpack.c.bf16 %v974, %v973
        %976 = vset.pattern.permute.xlu0 10
        %977 = vperm.xlu0 %976, %v833
        %v978 = vpop.permute.xlu0 %977
        %980 = vset.pattern.permute.xlu0 10
        %981 = vperm.xlu0 %980, %v834
        %v982 = vpop.permute.xlu0 %981
        %v986 = vunpack.c.l.b16 %v899
        %v987 = vunpack.c.l.b16 %v900
        %v988 = vpack.c.b16 %v987, %v986
        %v990 = vsel %vm408, %v988, 0
        %992 = vmatprep.subr.bf16.mxu0 0
        %993 = vmatpush1.bf16.msra.mxu0 %v975
        %994 = vmatprep.subr.bf16.mxu0 0
        %995 = vmatpush1.bf16.msra.mxu0 0
        %996 = vmatprep.subr.bf16.mxu0 0
        %997 = vmatpush1.bf16.msra.mxu0 0
        %998 = vmatprep.subr.bf16.mxu0 0
        %999 = vmatpush1.bf16.msra.mxu0 0
        %1000 = vmatprep.subr.bf16.mxu0 0
        %1001 = vmatpush1.bf16.msra.mxu0 0
        %1002 = vmatprep.subr.bf16.mxu0 0
        %1003 = vmatpush1.bf16.msra.mxu0 0
        %1004 = vmatprep.subr.bf16.mxu0 0
        %1005 = vmatpush1.bf16.msra.mxu0 0
        %1006 = vmatprep.subr.bf16.mxu0 0
        %1007 = vmatpush1.bf16.msra.mxu0 0
        %1008 = vmatprep.subr.bf16.mxu0 0
        %1009 = vmatpush1.bf16.msra.mxu0 0
        %1010 = vmatprep.subr.bf16.mxu0 0
        %1011 = vmatpush1.bf16.msra.mxu0 0
        %1012 = vmatprep.subr.bf16.mxu0 0
        %1013 = vmatpush1.bf16.msra.mxu0 0
        %1014 = vmatprep.subr.bf16.mxu0 0
        %1015 = vmatpush1.bf16.msra.mxu0 0
        %1016 = vmatprep.subr.bf16.mxu0 0
        %1017 = vmatpush1.bf16.msra.mxu0 0
        %1018 = vmatprep.subr.bf16.mxu0 0
        %1019 = vmatpush1.bf16.msra.mxu0 0
        %1020 = vmatprep.subr.bf16.mxu0 0
        %1021 = vmatpush1.bf16.msra.mxu0 0
        %1022 = vmatprep.subr.bf16.mxu0 0
        %1023 = vmatpush1.bf16.msra.mxu0 0
        %1024 = vmatprep.mubr.bf16.mxu0 0
        %1025 = vmatmul.mubr.bf16.gmra.mrb[0].mxu0 %v990
        %v1026 = vpop.f32.mrb[0].mxu0
        %v1027 = vadd.f32 %v978, %v1026
        %v1028 = vpop.f32.mrb[0].mxu0
        %v1029 = vpop.f32.mrb[0].mxu0
        %v1030 = vadd.f32 %v982, %v1029
        %v1031 = vpop.f32.mrb[0].mxu0
        %1032 = vdwg.mxu0
        %v1033 = vadd.f32 %v891, %v1027
        %v1034 = vadd.f32 %v894, %v1030
        %v1035 = vmul.f32 %v1033, %v459
        %v1036 = vmul.f32 %v1034, %v459
        %v1037 = vld [vmem:[%s3 + $0x54] sm:$0xf]
        %v1038 = vld [vmem:[%s3 + $0x58] sm:$0xf]
        %v1039 = vld [vmem:[%s3 + $0x5c] sm:$0xf]
        %v1040 = vld [vmem:[%s3 + $0x60] sm:$0xf]
        %1041 = vrot.lane.b32.xlu0 %v1035, 2
        %v1042 = vpop.permute.xlu0 %1041
        %1043 = vrot.lane.b32.xlu0 %v1036, 2
        %v1044 = vpop.permute.xlu0 %1043
        %v1045 = vmul.f32 %v1042, %v474
        %v1046 = vmul.f32 %v1044, %v474
        %1047 = vrot.lane.b32.xlu0 %v1035, 126
        %v1048 = vpop.permute.xlu0 %1047
        %1049 = vrot.lane.b32.xlu0 %v1036, 126
        %v1050 = vpop.permute.xlu0 %1049
        %v1051 = vmul.f32 %v1048, %v484
        %v1052 = vmul.f32 %v1050, %v484
        %v1053 = vpack.c.bf16 %v1046, %v1045
        %v1054 = vpack.c.bf16 %v1036, %v1035
        %v1055 = vpack.c.bf16 %v1052, %v1051
        %1056 = vset.pattern.permute.xlu0 11
        %1057 = vperm.xlu0 %1056, %v833
        %v1058 = vpop.permute.xlu0 %1057
        %1060 = vset.pattern.permute.xlu0 11
        %1061 = vperm.xlu0 %1060, %v834
        %v1062 = vpop.permute.xlu0 %1061
        %v1066 = vunpack.c.l.b16 %v1037
        %v1067 = vunpack.c.l.b16 %v1038
        %v1068 = vpack.c.b16 %v1067, %v1066
        %v1070 = vsel %vm347, %v1068, 0
        %1072 = vmatprep.subr.bf16.mxu0 0
        %1073 = vmatpush1.bf16.msra.mxu0 %v1053
        %1074 = vmatprep.subr.bf16.mxu0 0
        %1075 = vmatpush1.bf16.msra.mxu0 %v1054
        %1076 = vmatprep.subr.bf16.mxu0 0
        %1077 = vmatpush1.bf16.msra.mxu0 %v1055
        %1078 = vmatprep.subr.bf16.mxu0 0
        %1079 = vmatpush1.bf16.msra.mxu0 0
        %1080 = vmatprep.subr.bf16.mxu0 0
        %1081 = vmatpush1.bf16.msra.mxu0 0
        %1082 = vmatprep.subr.bf16.mxu0 0
        %1083 = vmatpush1.bf16.msra.mxu0 0
        %1084 = vmatprep.subr.bf16.mxu0 0
        %1085 = vmatpush1.bf16.msra.mxu0 0
        %1086 = vmatprep.subr.bf16.mxu0 0
        %1087 = vmatpush1.bf16.msra.mxu0 0
        %1088 = vmatprep.subr.bf16.mxu0 0
        %1089 = vmatpush1.bf16.msra.mxu0 0
        %1090 = vmatprep.subr.bf16.mxu0 0
        %1091 = vmatpush1.bf16.msra.mxu0 0
        %1092 = vmatprep.subr.bf16.mxu0 0
        %1093 = vmatpush1.bf16.msra.mxu0 0
        %1094 = vmatprep.subr.bf16.mxu0 0
        %1095 = vmatpush1.bf16.msra.mxu0 0
        %1096 = vmatprep.subr.bf16.mxu0 0
        %1097 = vmatpush1.bf16.msra.mxu0 0
        %1098 = vmatprep.subr.bf16.mxu0 0
        %1099 = vmatpush1.bf16.msra.mxu0 0
        %1100 = vmatprep.subr.bf16.mxu0 0
        %1101 = vmatpush1.bf16.msra.mxu0 0
        %1102 = vmatprep.subr.bf16.mxu0 0
        %1103 = vmatpush1.bf16.msra.mxu0 0
        %1104 = vmatprep.mubr.bf16.mxu0 0
        %1105 = vmatmul.mubr.bf16.gmra.mrb[0].mxu0 %v1070
        %v1106 = vpop.f32.mrb[0].mxu0
        %v1107 = vadd.f32 %v1058, %v1106
        %v1108 = vpop.f32.mrb[0].mxu0
        %v1109 = vpop.f32.mrb[0].mxu0
        %v1110 = vadd.f32 %v1062, %v1109
        %v1111 = vpop.f32.mrb[0].mxu0
        %1112 = vdwg.mxu0
        %v1113 = vmax.f32 %v1107, 0.0
        %v1114 = vmax.f32 %v1110, 0.0
        %v1115 = vpack.c.bf16 %v1114, %v1113
        %1116 = vset.pattern.permute.xlu0 12
        %1117 = vperm.xlu0 %1116, %v833
        %v1118 = vpop.permute.xlu0 %1117
        %1120 = vset.pattern.permute.xlu0 12
        %1121 = vperm.xlu0 %1120, %v834
        %v1122 = vpop.permute.xlu0 %1121
        %v1126 = vunpack.c.l.b16 %v1039
        %v1127 = vunpack.c.l.b16 %v1040
        %v1128 = vpack.c.b16 %v1127, %v1126
        %v1130 = vsel %vm408, %v1128, 0
        %1132 = vmatprep.subr.bf16.mxu0 0
        %1133 = vmatpush1.bf16.msra.mxu0 %v1115
        %1134 = vmatprep.subr.bf16.mxu0 0
        %1135 = vmatpush1.bf16.msra.mxu0 0
        %1136 = vmatprep.subr.bf16.mxu0 0
        %1137 = vmatpush1.bf16.msra.mxu0 0
        %1138 = vmatprep.subr.bf16.mxu0 0
        %1139 = vmatpush1.bf16.msra.mxu0 0
        %1140 = vmatprep.subr.bf16.mxu0 0
        %1141 = vmatpush1.bf16.msra.mxu0 0
        %1142 = vmatprep.subr.bf16.mxu0 0
        %1143 = vmatpush1.bf16.msra.mxu0 0
        %1144 = vmatprep.subr.bf16.mxu0 0
        %1145 = vmatpush1.bf16.msra.mxu0 0
        %1146 = vmatprep.subr.bf16.mxu0 0
        %1147 = vmatpush1.bf16.msra.mxu0 0
        %1148 = vmatprep.subr.bf16.mxu0 0
        %1149 = vmatpush1.bf16.msra.mxu0 0
        %1150 = vmatprep.subr.bf16.mxu0 0
        %1151 = vmatpush1.bf16.msra.mxu0 0
        %1152 = vmatprep.subr.bf16.mxu0 0
        %1153 = vmatpush1.bf16.msra.mxu0 0
        %1154 = vmatprep.subr.bf16.mxu0 0
        %1155 = vmatpush1.bf16.msra.mxu0 0
        %1156 = vmatprep.subr.bf16.mxu0 0
        %1157 = vmatpush1.bf16.msra.mxu0 0
        %1158 = vmatprep.subr.bf16.mxu0 0
        %1159 = vmatpush1.bf16.msra.mxu0 0
        %1160 = vmatprep.subr.bf16.mxu0 0
        %1161 = vmatpush1.bf16.msra.mxu0 0
        %1162 = vmatprep.subr.bf16.mxu0 0
        %1163 = vmatpush1.bf16.msra.mxu0 0
        %1164 = vmatprep.mubr.bf16.mxu0 0
        %1165 = vmatmul.mubr.bf16.gmra.mrb[0].mxu0 %v1130
        %v1166 = vpop.f32.mrb[0].mxu0
        %v1167 = vadd.f32 %v1118, %v1166
        %v1168 = vpop.f32.mrb[0].mxu0
        %v1169 = vpop.f32.mrb[0].mxu0
        %v1170 = vadd.f32 %v1122, %v1169
        %v1171 = vpop.f32.mrb[0].mxu0
        %1172 = vdwg.mxu0
        %v1173 = vadd.f32 %v1035, %v1167
        %v1174 = vadd.f32 %v1036, %v1170
        %v1175 = vmul.f32 %v1173, %v459
        %v1176 = vmul.f32 %v1174, %v459
        %v1177 = vld [vmem:[%s3 + $0x64] sm:$0xf]
        %v1178 = vld [vmem:[%s3 + $0x68] sm:$0xf]
        %v1179 = vld [vmem:[%s3 + $0x6c] sm:$0xf]
        %v1180 = vld [vmem:[%s3 + $0x70] sm:$0xf]
        %1181 = vrot.lane.b32.xlu0 %v1175, 4
        %v1182 = vpop.permute.xlu0 %1181
        %1183 = vrot.lane.b32.xlu0 %v1176, 4
        %v1184 = vpop.permute.xlu0 %1183
        %v1185 = vmul.f32 %v1182, %v622
        %v1186 = vmul.f32 %v1184, %v622
        %1187 = vrot.lane.b32.xlu0 %v1175, 124
        %v1188 = vpop.permute.xlu0 %1187
        %1189 = vrot.lane.b32.xlu0 %v1176, 124
        %v1190 = vpop.permute.xlu0 %1189
        %v1191 = vmul.f32 %v1188, %v632
        %v1192 = vmul.f32 %v1190, %v632
        %v1193 = vpack.c.bf16 %v1186, %v1185
        %v1194 = vpack.c.bf16 %v1176, %v1175
        %v1195 = vpack.c.bf16 %v1192, %v1191
        %1196 = vset.pattern.permute.xlu0 13
        %1197 = vperm.xlu0 %1196, %v833
        %v1198 = vpop.permute.xlu0 %1197
        %1200 = vset.pattern.permute.xlu0 13
        %1201 = vperm.xlu0 %1200, %v834
        %v1202 = vpop.permute.xlu0 %1201
        %v1206 = vunpack.c.l.b16 %v1177
        %v1207 = vunpack.c.l.b16 %v1178
        %v1208 = vpack.c.b16 %v1207, %v1206
        %v1210 = vsel %vm347, %v1208, 0
        %1212 = vmatprep.subr.bf16.mxu0 0
        %1213 = vmatpush1.bf16.msra.mxu0 %v1193
        %1214 = vmatprep.subr.bf16.mxu0 0
        %1215 = vmatpush1.bf16.msra.mxu0 %v1194
        %1216 = vmatprep.subr.bf16.mxu0 0
        %1217 = vmatpush1.bf16.msra.mxu0 %v1195
        %1218 = vmatprep.subr.bf16.mxu0 0
        %1219 = vmatpush1.bf16.msra.mxu0 0
        %1220 = vmatprep.subr.bf16.mxu0 0
        %1221 = vmatpush1.bf16.msra.mxu0 0
        %1222 = vmatprep.subr.bf16.mxu0 0
        %1223 = vmatpush1.bf16.msra.mxu0 0
        %1224 = vmatprep.subr.bf16.mxu0 0
        %1225 = vmatpush1.bf16.msra.mxu0 0
        %1226 = vmatprep.subr.bf16.mxu0 0
        %1227 = vmatpush1.bf16.msra.mxu0 0
        %1228 = vmatprep.subr.bf16.mxu0 0
        %1229 = vmatpush1.bf16.msra.mxu0 0
        %1230 = vmatprep.subr.bf16.mxu0 0
        %1231 = vmatpush1.bf16.msra.mxu0 0
        %1232 = vmatprep.subr.bf16.mxu0 0
        %1233 = vmatpush1.bf16.msra.mxu0 0
        %1234 = vmatprep.subr.bf16.mxu0 0
        %1235 = vmatpush1.bf16.msra.mxu0 0
        %1236 = vmatprep.subr.bf16.mxu0 0
        %1237 = vmatpush1.bf16.msra.mxu0 0
        %1238 = vmatprep.subr.bf16.mxu0 0
        %1239 = vmatpush1.bf16.msra.mxu0 0
        %1240 = vmatprep.subr.bf16.mxu0 0
        %1241 = vmatpush1.bf16.msra.mxu0 0
        %1242 = vmatprep.subr.bf16.mxu0 0
        %1243 = vmatpush1.bf16.msra.mxu0 0
        %1244 = vmatprep.mubr.bf16.mxu0 0
        %1245 = vmatmul.mubr.bf16.gmra.mrb[0].mxu0 %v1210
        %v1246 = vpop.f32.mrb[0].mxu0
        %v1247 = vadd.f32 %v1198, %v1246
        %v1248 = vpop.f32.mrb[0].mxu0
        %v1249 = vpop.f32.mrb[0].mxu0
        %v1250 = vadd.f32 %v1202, %v1249
        %v1251 = vpop.f32.mrb[0].mxu0
        %1252 = vdwg.mxu0
        %v1253 = vmax.f32 %v1247, 0.0
        %v1254 = vmax.f32 %v1250, 0.0
        %v1255 = vpack.c.bf16 %v1254, %v1253
        %1256 = vset.pattern.permute.xlu0 14
        %1257 = vperm.xlu0 %1256, %v833
        %v1258 = vpop.permute.xlu0 %1257
        %1260 = vset.pattern.permute.xlu0 14
        %1261 = vperm.xlu0 %1260, %v834
        %v1262 = vpop.permute.xlu0 %1261
        %v1266 = vunpack.c.l.b16 %v1179
        %v1267 = vunpack.c.l.b16 %v1180
        %v1268 = vpack.c.b16 %v1267, %v1266
        %v1270 = vsel %vm408, %v1268, 0
        %1272 = vmatprep.subr.bf16.mxu0 0
        %1273 = vmatpush1.bf16.msra.mxu0 %v1255
        %1274 = vmatprep.subr.bf16.mxu0 0
        %1275 = vmatpush1.bf16.msra.mxu0 0
        %1276 = vmatprep.subr.bf16.mxu0 0
        %1277 = vmatpush1.bf16.msra.mxu0 0
        %1278 = vmatprep.subr.bf16.mxu0 0
        %1279 = vmatpush1.bf16.msra.mxu0 0
        %1280 = vmatprep.subr.bf16.mxu0 0
        %1281 = vmatpush1.bf16.msra.mxu0 0
        %1282 = vmatprep.subr.bf16.mxu0 0
        %1283 = vmatpush1.bf16.msra.mxu0 0
        %1284 = vmatprep.subr.bf16.mxu0 0
        %1285 = vmatpush1.bf16.msra.mxu0 0
        %1286 = vmatprep.subr.bf16.mxu0 0
        %1287 = vmatpush1.bf16.msra.mxu0 0
        %1288 = vmatprep.subr.bf16.mxu0 0
        %1289 = vmatpush1.bf16.msra.mxu0 0
        %1290 = vmatprep.subr.bf16.mxu0 0
        %1291 = vmatpush1.bf16.msra.mxu0 0
        %1292 = vmatprep.subr.bf16.mxu0 0
        %1293 = vmatpush1.bf16.msra.mxu0 0
        %1294 = vmatprep.subr.bf16.mxu0 0
        %1295 = vmatpush1.bf16.msra.mxu0 0
        %1296 = vmatprep.subr.bf16.mxu0 0
        %1297 = vmatpush1.bf16.msra.mxu0 0
        %1298 = vmatprep.subr.bf16.mxu0 0
        %1299 = vmatpush1.bf16.msra.mxu0 0
        %1300 = vmatprep.subr.bf16.mxu0 0
        %1301 = vmatpush1.bf16.msra.mxu0 0
        %1302 = vmatprep.subr.bf16.mxu0 0
        %1303 = vmatpush1.bf16.msra.mxu0 0
        %1304 = vmatprep.mubr.bf16.mxu0 0
        %1305 = vmatmul.mubr.bf16.gmra.mrb[0].mxu0 %v1270
        %v1306 = vpop.f32.mrb[0].mxu0
        %v1307 = vadd.f32 %v1258, %v1306
        %v1308 = vpop.f32.mrb[0].mxu0
        %v1309 = vpop.f32.mrb[0].mxu0
        %v1310 = vadd.f32 %v1262, %v1309
        %v1311 = vpop.f32.mrb[0].mxu0
        %1312 = vdwg.mxu0
        %v1313 = vadd.f32 %v1175, %v1307
        %v1314 = vadd.f32 %v1176, %v1310
        %v1315 = vmul.f32 %v1313, %v459
        %v1316 = vmul.f32 %v1314, %v459
        %v1317 = vld [vmem:[%s3 + $0x74] sm:$0xf]
        %v1318 = vpack.c.bf16 %v1316, %v1315
        %v1319 = vld [vmem:[%s4] sm:$0xff]
        %1321 = vset.pattern.permute.xlu0 15
        %1322 = vperm.xlu0 %1321, %v1319
        %v1323 = vpop.permute.xlu0 %1322
        %v1326 = vsel %vm408, %v1317, 0
        %1328 = vmatprep.subr.bf16.mxu0 0
        %1329 = vmatpush1.bf16.msra.mxu0 %v1318
        %1330 = vmatprep.subr.bf16.mxu0 0
        %1331 = vmatpush1.bf16.msra.mxu0 0
        %1332 = vmatprep.subr.bf16.mxu0 0
        %1333 = vmatpush1.bf16.msra.mxu0 0
        %1334 = vmatprep.subr.bf16.mxu0 0
        %1335 = vmatpush1.bf16.msra.mxu0 0
        %1336 = vmatprep.subr.bf16.mxu0 0
        %1337 = vmatpush1.bf16.msra.mxu0 0
        %1338 = vmatprep.subr.bf16.mxu0 0
        %1339 = vmatpush1.bf16.msra.mxu0 0
        %1340 = vmatprep.subr.bf16.mxu0 0
        %1341 = vmatpush1.bf16.msra.mxu0 0
        %1342 = vmatprep.subr.bf16.mxu0 0
        %1343 = vmatpush1.bf16.msra.mxu0 0
        %1344 = vmatprep.subr.bf16.mxu0 0
        %1345 = vmatpush1.bf16.msra.mxu0 0
        %1346 = vmatprep.subr.bf16.mxu0 0
        %1347 = vmatpush1.bf16.msra.mxu0 0
        %1348 = vmatprep.subr.bf16.mxu0 0
        %1349 = vmatpush1.bf16.msra.mxu0 0
        %1350 = vmatprep.subr.bf16.mxu0 0
        %1351 = vmatpush1.bf16.msra.mxu0 0
        %1352 = vmatprep.subr.bf16.mxu0 0
        %1353 = vmatpush1.bf16.msra.mxu0 0
        %1354 = vmatprep.subr.bf16.mxu0 0
        %1355 = vmatpush1.bf16.msra.mxu0 0
        %1356 = vmatprep.subr.bf16.mxu0 0
        %1357 = vmatpush1.bf16.msra.mxu0 0
        %1358 = vmatprep.subr.bf16.mxu0 0
        %1359 = vmatpush1.bf16.msra.mxu0 0
        %1360 = vmatprep.mubr.bf16.mxu0 0
        %1361 = vmatmul.mubr.bf16.gmra.mrb[0].mxu0 %v1326
        %v1362 = vpop.f32.mrb[0].mxu0
        %v1363 = vadd.f32 %v1323, %v1362
        %v1364 = vpop.f32.mrb[0].mxu0
        %v1365 = vpop.f32.mrb[0].mxu0
        %v1366 = vpop.f32.mrb[0].mxu0
        %1367 = vdwg.mxu0
        %v1368 = vmul.f32 %v1363, %v459
        %s1369 = scalar_lea.vmem %s226, 8 [#allocation2]
        %1370 = vst [vmem:[%s1369] sm:$0xff] %v1368
        %s1371 = sand.u32 %s142, 1
        %s1372 = scalar_lea.sflag [#allocation3], %s1371
        %s1373 = sand.u32 %s142, 1
        %s1374 = smul.addr %s1373, 16
        %s1375 = scalar_lea.vmem [#allocation2], %s1374
        // Predicated region
        $region41: #{multi_stage_forward.1} parent=39 // pred_check
          %p1376 = pneg %p152
        $region42: #{multi_stage_forward.1} parent=39 // pred_check_branch
          %1378 = sbr.rel (%p1376) target = $region44
        $region43: #{multi_stage_forward.1} parent=39 // pred_region
          %s1380 = ssub.s32 256, 256
          %1381 = vsyncadd %s1372, %s1380
          %s1382 = smul.addr %s19, 128
          %s1383 = scalar_lea.hbm %s5, %s1382
          %s1384 = sshll.u32 %s1375, 4
          %s1385 = int_to_ptr.vmem [resolvable:$true] %s1384
          %1390 = dma.vmem_to_hbm [thread:$0]  %s1385, 256, %s1383, %s1372, 128, 256, 8
        $region44: #{multi_stage_forward.1} parent=39 // pred_fallthru
          _
      $region40: #{multi_stage_forward.1} parent=5 // pred_fallthru
        _
      %p1391 = scmp.le.s32.totalorder 2, %s14
      // Predicated region
      $region45: #{multi_stage_forward.1} parent=5 // pred_check
        %p1392 = pneg %p1391
      $region46: #{multi_stage_forward.1} parent=5 // pred_check_branch
        %1394 = sbr.rel (%p1392) target = $region48
      $region47: #{multi_stage_forward.1} parent=5 // pred_region
        %s1395 = ssub.s32 %s14, 2
        // Predicated region
        $region49: #{multi_stage_forward.1} parent=47 // pred_check
          %p1396 = pneg %p158
        $region50: #{multi_stage_forward.1} parent=47 // pred_check_branch
          %1398 = sbr.rel (%p1396) target = $region52
        $region51: #{multi_stage_forward.1} parent=47 // pred_region
          %s1399 = sand.u32 %s143, 1
          %s1400 = scalar_lea.sflag [#allocation3], %s1399
          %s1401 = sand.u32 %s143, 1
          %s1402 = smul.addr %s1401, 16
          %s1403 = scalar_lea.vmem [#allocation2], %s1402
          %1404 = dma.done %s1400, 256
        $region52: #{multi_stage_forward.1} parent=47 // pred_fallthru
          _
      $region48: #{multi_stage_forward.1} parent=5 // pred_fallthru
        _
    $region6: #{multi_stage_forward.1} parent=1 // loop_footer
      %s18 = sadd.s32 1, %s14
    $region7: #{multi_stage_forward.1} parent=1 // loop_footer_branch
      %13 = sbr.rel target = $region3
    $region8: #{multi_stage_forward.1} parent=1 // loop_exit
      _
    %1405 = vsyncpa [#allocation3], 1
    %s1406 = scalar_lea.sflag [#allocation3], 1
    %1407 = vsyncpa %s1406, 1

</llo_original>
